<compile_context>
chip_gen: v6e
topology: v6e:2x2x1
jax: 0.10.0
libtpu: 0.0.40
codegen_flags: <defaults>
</compile_context>

<pallas_src>
import jax
import jax.numpy as jnp
from jax.experimental import pallas as pl
from jax.experimental.pallas import tpu as pltpu

N = 128   # nodes
D = 128   # feature dim (in_dim of DAGNNConv) -- lane-dense
K = 4     # propagation hops


def dagnn_conv_kernel(adj_ref, feats_ref, norm_col_ref, norm_row_ref,
                      s_row_ref, out_ref):
    """All operands resident in VMEM. Hot path = K dense [N,N]x[N,D] MXU
    matmuls; gating/score work runs on VPU + XLU + EUP in parallel."""
    # Fold the symmetric normalization into the adjacency once:
    #   adj_n[v, u] = norm[v] * A[v, u] * norm[u]
    adj_n = adj_ref[...] * norm_col_ref[...] * norm_row_ref[...]    # [N, N]

    x = feats_ref[...]                  # [N, D] f32
    s_row = s_row_ref[...]              # [1, D] f32 (hoisted once, reused every hop)

    # Gating score for hop 0: VPU multiply + cross-lane sum (XLU) + sigmoid (EUP).
    score = jax.nn.sigmoid(
        jnp.sum(x * s_row, axis=-1, keepdims=True))                 # [N, 1]
    acc = score * x                                                  # hop 0 term

    # Hops 1..K (static Python loop -> fully unrolled).
    for _ in range(K):
        x = jnp.dot(adj_n, x, preferred_element_type=jnp.float32)   # MXU
        score = jax.nn.sigmoid(
            jnp.sum(x * s_row, axis=-1, keepdims=True))             # VPU+XLU+EUP
        acc = acc + score * x

    out_ref[...] = acc                                               # lane-dense vst


def dagnn_conv(adj, feats, norm, s):
    """adj: [N, N] dense adjacency (A[v,u]=1 for edge u->v); feats: [N, D];
    norm: [N] = in_degrees^(-0.5); s: [D, 1] gating parameter."""
    n, d = feats.shape
    # Layout plumbing done in the wrapper so the kernel needs no relayouts.
    norm_col = norm.reshape(n, 1).astype(jnp.float32)
    norm_row = norm.reshape(1, n).astype(jnp.float32)
    s_row = s.reshape(1, d).astype(jnp.float32)

    vmem = pl.BlockSpec(memory_space=pltpu.MemorySpace.VMEM)
    return pl.pallas_call(
        dagnn_conv_kernel,
        out_shape=jax.ShapeDtypeStruct((n, d), jnp.float32),
        in_specs=[vmem, vmem, vmem, vmem, vmem],
        out_specs=vmem,
    )(adj.astype(jnp.float32), feats.astype(jnp.float32), norm_col, norm_row,
      s_row)


def reference(adj, feats, norm, s):
    """Plain-JAX reference mirroring the PyTorch forward literally."""
    hi = jax.lax.Precision.HIGHEST
    norm_c = norm.reshape(-1, 1)
    results = [feats]
    x = feats
    for _ in range(K):
        x = x * norm_c
        x = jnp.dot(adj, x, precision=hi)
        x = x * norm_c
        results.append(x)
    H = jnp.stack(results, axis=1)                                  # [N, K+1, D]
    S = jax.nn.sigmoid(jnp.matmul(H, s, precision=hi))              # [N, K+1, 1]
    S = jnp.transpose(S, (0, 2, 1))                                 # [N, 1, K+1]
    return jnp.matmul(S, H, precision=hi).squeeze(1)                # [N, D]


if __name__ == "__main__":
    key = jax.random.PRNGKey(0)
    k_adj, k_feat, k_s = jax.random.split(key, 3)

    # Deterministic synthetic graph: random edges + self-loops (no 0 in-degree).
    adj = (jax.random.uniform(k_adj, (N, N)) < 0.1).astype(jnp.float32)
    adj = jnp.maximum(adj, jnp.eye(N, dtype=jnp.float32))   # A[v,u]=1 iff edge u->v

    feats = jax.random.normal(k_feat, (N, D), dtype=jnp.float32)

    # in_degrees()^(-0.5)  -> [N]
    degs = jnp.sum(adj, axis=1)
    norm = jnp.power(degs, -0.5).astype(jnp.float32)

    # Parameter s: xavier_uniform_ with gain = calculate_gain('sigmoid') = 1.0.
    # For a (in_dim, 1) tensor: fan_in = 1, fan_out = in_dim.
    gain = 1.0
    bound = gain * (6.0 / (D + 1)) ** 0.5
    s = jax.random.uniform(k_s, (D, 1), minval=-bound, maxval=bound,
                           dtype=jnp.float32)

    out = dagnn_conv(adj, feats, norm, s)
    out = jax.block_until_ready(out)

    ref = reference(adj, feats, norm, s)
    assert out.shape == (N, D)
    assert jnp.allclose(out, ref, atol=1e-3, rtol=1e-3), "mismatch vs reference"

    print("KERNEL_OK")
</pallas_src>

<mosaic_0001>
module attributes {stable_mosaic.version = 11 : i64} {
  func.func @dagnn_conv_kernel(%arg0: memref<128x128xf32, #tpu.memory_space<vmem>>, %arg1: memref<128x128xf32, #tpu.memory_space<vmem>>, %arg2: memref<128x1xf32, #tpu.memory_space<vmem>>, %arg3: memref<1x128xf32, #tpu.memory_space<vmem>>, %arg4: memref<1x128xf32, #tpu.memory_space<vmem>>, %arg5: memref<128x128xf32, #tpu.memory_space<vmem>>) attributes {dimension_semantics = [], scalar_prefetch = 0 : i64, scratch_operands = 0 : i64, tpu.core_type = #tpu.core_type<tc>} {
    %c0 = arith.constant 0 : index
    %c0_0 = arith.constant 0 : index
    %0 = vector.load %arg0[%c0, %c0_0] : memref<128x128xf32, #tpu.memory_space<vmem>>, vector<128x128xf32>
    %c0_1 = arith.constant 0 : index
    %c0_2 = arith.constant 0 : index
    %1 = vector.load %arg2[%c0_1, %c0_2] : memref<128x1xf32, #tpu.memory_space<vmem>>, vector<128x1xf32>
    %2 = vector.broadcast %1 : vector<128x1xf32> to vector<128x128xf32>
    %3 = arith.mulf %0, %2 : vector<128x128xf32>
    %c0_3 = arith.constant 0 : index
    %c0_4 = arith.constant 0 : index
    %4 = vector.load %arg3[%c0_3, %c0_4] : memref<1x128xf32, #tpu.memory_space<vmem>>, vector<1x128xf32>
    %5 = vector.broadcast %4 : vector<1x128xf32> to vector<128x128xf32>
    %6 = arith.mulf %3, %5 : vector<128x128xf32>
    %c0_5 = arith.constant 0 : index
    %c0_6 = arith.constant 0 : index
    %7 = vector.load %arg1[%c0_5, %c0_6] : memref<128x128xf32, #tpu.memory_space<vmem>>, vector<128x128xf32>
    %c0_7 = arith.constant 0 : index
    %c0_8 = arith.constant 0 : index
    %8 = vector.load %arg4[%c0_7, %c0_8] : memref<1x128xf32, #tpu.memory_space<vmem>>, vector<1x128xf32>
    %9 = vector.broadcast %8 : vector<1x128xf32> to vector<128x128xf32>
    %10 = arith.mulf %7, %9 : vector<128x128xf32>
    %cst = arith.constant dense<0.000000e+00> : vector<128xf32>
    %11 = vector.multi_reduction <add>, %10, %cst [1] : vector<128x128xf32> to vector<128xf32>
    %12 = vector.shape_cast %11 : vector<128xf32> to vector<128x1xf32>
    %13 = arith.negf %12 : vector<128x1xf32>
    %14 = math.exp %13 : vector<128x1xf32>
    %cst_9 = arith.constant 1.000000e+00 : f32
    %15 = vector.broadcast %cst_9 : f32 to vector<128x1xf32>
    %16 = arith.addf %15, %14 : vector<128x1xf32>
    %17 = arith.divf %15, %16 : vector<128x1xf32>
    %18 = vector.broadcast %17 : vector<128x1xf32> to vector<128x128xf32>
    %19 = arith.mulf %18, %7 : vector<128x128xf32>
    %cst_10 = arith.constant dense<0.000000e+00> : vector<128x128xf32>
    %20 = tpu.matmul %6, %7, %cst_10 {dimension_numbers = #tpu.dot_dimension_numbers<[1], [0], [0], [1], [0, 0, 1, 1], [], []>} : vector<128x128xf32>, vector<128x128xf32>, vector<128x128xf32> -> vector<128x128xf32>
    %21 = vector.broadcast %8 : vector<1x128xf32> to vector<128x128xf32>
    %22 = arith.mulf %20, %21 : vector<128x128xf32>
    %cst_11 = arith.constant dense<0.000000e+00> : vector<128xf32>
    %23 = vector.multi_reduction <add>, %22, %cst_11 [1] : vector<128x128xf32> to vector<128xf32>
    %24 = vector.shape_cast %23 : vector<128xf32> to vector<128x1xf32>
    %25 = arith.negf %24 : vector<128x1xf32>
    %26 = math.exp %25 : vector<128x1xf32>
    %cst_12 = arith.constant 1.000000e+00 : f32
    %27 = vector.broadcast %cst_12 : f32 to vector<128x1xf32>
    %28 = arith.addf %27, %26 : vector<128x1xf32>
    %29 = arith.divf %27, %28 : vector<128x1xf32>
    %30 = vector.broadcast %29 : vector<128x1xf32> to vector<128x128xf32>
    %31 = arith.mulf %30, %20 : vector<128x128xf32>
    %32 = arith.addf %19, %31 : vector<128x128xf32>
    %cst_13 = arith.constant dense<0.000000e+00> : vector<128x128xf32>
    %33 = tpu.matmul %6, %20, %cst_13 {dimension_numbers = #tpu.dot_dimension_numbers<[1], [0], [0], [1], [0, 0, 1, 1], [], []>} : vector<128x128xf32>, vector<128x128xf32>, vector<128x128xf32> -> vector<128x128xf32>
    %34 = vector.broadcast %8 : vector<1x128xf32> to vector<128x128xf32>
    %35 = arith.mulf %33, %34 : vector<128x128xf32>
    %cst_14 = arith.constant dense<0.000000e+00> : vector<128xf32>
    %36 = vector.multi_reduction <add>, %35, %cst_14 [1] : vector<128x128xf32> to vector<128xf32>
    %37 = vector.shape_cast %36 : vector<128xf32> to vector<128x1xf32>
    %38 = arith.negf %37 : vector<128x1xf32>
    %39 = math.exp %38 : vector<128x1xf32>
    %cst_15 = arith.constant 1.000000e+00 : f32
    %40 = vector.broadcast %cst_15 : f32 to vector<128x1xf32>
    %41 = arith.addf %40, %39 : vector<128x1xf32>
    %42 = arith.divf %40, %41 : vector<128x1xf32>
    %43 = vector.broadcast %42 : vector<128x1xf32> to vector<128x128xf32>
    %44 = arith.mulf %43, %33 : vector<128x128xf32>
    %45 = arith.addf %32, %44 : vector<128x128xf32>
    %cst_16 = arith.constant dense<0.000000e+00> : vector<128x128xf32>
    %46 = tpu.matmul %6, %33, %cst_16 {dimension_numbers = #tpu.dot_dimension_numbers<[1], [0], [0], [1], [0, 0, 1, 1], [], []>} : vector<128x128xf32>, vector<128x128xf32>, vector<128x128xf32> -> vector<128x128xf32>
    %47 = vector.broadcast %8 : vector<1x128xf32> to vector<128x128xf32>
    %48 = arith.mulf %46, %47 : vector<128x128xf32>
    %cst_17 = arith.constant dense<0.000000e+00> : vector<128xf32>
    %49 = vector.multi_reduction <add>, %48, %cst_17 [1] : vector<128x128xf32> to vector<128xf32>
    %50 = vector.shape_cast %49 : vector<128xf32> to vector<128x1xf32>
    %51 = arith.negf %50 : vector<128x1xf32>
    %52 = math.exp %51 : vector<128x1xf32>
    %cst_18 = arith.constant 1.000000e+00 : f32
    %53 = vector.broadcast %cst_18 : f32 to vector<128x1xf32>
    %54 = arith.addf %53, %52 : vector<128x1xf32>
    %55 = arith.divf %53, %54 : vector<128x1xf32>
    %56 = vector.broadcast %55 : vector<128x1xf32> to vector<128x128xf32>
    %57 = arith.mulf %56, %46 : vector<128x128xf32>
    %58 = arith.addf %45, %57 : vector<128x128xf32>
    %cst_19 = arith.constant dense<0.000000e+00> : vector<128x128xf32>
    %59 = tpu.matmul %6, %46, %cst_19 {dimension_numbers = #tpu.dot_dimension_numbers<[1], [0], [0], [1], [0, 0, 1, 1], [], []>} : vector<128x128xf32>, vector<128x128xf32>, vector<128x128xf32> -> vector<128x128xf32>
    %60 = vector.broadcast %8 : vector<1x128xf32> to vector<128x128xf32>
    %61 = arith.mulf %59, %60 : vector<128x128xf32>
    %cst_20 = arith.constant dense<0.000000e+00> : vector<128xf32>
    %62 = vector.multi_reduction <add>, %61, %cst_20 [1] : vector<128x128xf32> to vector<128xf32>
    %63 = vector.shape_cast %62 : vector<128xf32> to vector<128x1xf32>
    %64 = arith.negf %63 : vector<128x1xf32>
    %65 = math.exp %64 : vector<128x1xf32>
    %cst_21 = arith.constant 1.000000e+00 : f32
    %66 = vector.broadcast %cst_21 : f32 to vector<128x1xf32>
    %67 = arith.addf %66, %65 : vector<128x1xf32>
    %68 = arith.divf %66, %67 : vector<128x1xf32>
    %69 = vector.broadcast %68 : vector<128x1xf32> to vector<128x128xf32>
    %70 = arith.mulf %69, %59 : vector<128x128xf32>
    %71 = arith.addf %58, %70 : vector<128x128xf32>
    %c0_22 = arith.constant 0 : index
    %c0_23 = arith.constant 0 : index
    %72 = vector.load %arg5[%c0_22, %c0_23] : memref<128x128xf32, #tpu.memory_space<vmem>>, vector<128x128xf32>
    tpu.vector_store %arg5[%c0_22, %c0_23], %71 {strides = array<i32>} : memref<128x128xf32, #tpu.memory_space<vmem>>, vector<128x128xf32>,
    return
  }
}

</mosaic_0001>

<llo_original>
// kernel: tpu_custom_call.1
$region0: #{tpu_custom_call.1}
  #allocation0 [shape = 'u32[]', space=smem, size = 0x4, offset = 0x4, fixed_abs, tag = 'smem constant byte address 0x4 - core index']
  #allocation1 [shape = 'u32[144,128]{1,0:T(1,128)}', space=vmem, size = 0x12000, scoped, tag = 'internal scratch']
  %s0 = inlined_call_operand.vmem [shape: f32[128,128], index: 0, kind: input, shape index: {}]
  %s1 = inlined_call_operand.hbm [shape: f32[128,128], index: 1, kind: input, shape index: {}]
  %s2 = inlined_call_operand.vmem [shape: f32[128,1], index: 2, kind: input, shape index: {}]
  %s3 = inlined_call_operand.vmem [shape: f32[1,128], index: 3, kind: input, shape index: {}]
  %s4 = inlined_call_operand.vmem [shape: f32[1,128], index: 4, kind: input, shape index: {}]
  %s5 = inlined_call_operand.hbm [shape: f32[128,128], index: 5, kind: output, shape index: {}]
  %s6 = sld [smem:[#allocation0]]
  $region34: #{tpu_custom_call.1} parent=0
    _
  %s8 = ssub.s32 1, %s6
  %s9 = scalar_select 0, %s8, %s6
  $region1: #{tpu_custom_call.1} parent=0
    #allocation2 [shape = 'u8[65536]{0}', space=vmem, size = 0x10000, scoped, tag = 'input window, operand 1, single buffered']
    #allocation3 [shape = 's32[1]{0}', space=sflag, size = 0x4, scoped, tag = 'scoped memory for tpu_custom_call.1']
    #allocation4 [shape = 's32[1]{0}', space=sflag, size = 0x4, scoped, tag = 'scoped memory for tpu_custom_call.1']
    #allocation5 [shape = 'u8[65536]{0}', space=vmem, size = 0x10000, scoped, tag = 'output window, operand 0, single buffered']
    %10 = vsyncpa [#allocation3], 0
    %11 = vsyncpa [#allocation4], 0
    // Predicated region
    $region2: #{tpu_custom_call.1} parent=1 // pred_check
      _
    $region3: #{tpu_custom_call.1} parent=1 // pred_check_branch
      %13 = sbr.rel (0) target = $region5
    $region4: #{tpu_custom_call.1} parent=1 // pred_region
      _
    $region5: #{tpu_custom_call.1} parent=1 // pred_fallthru
      _
    // Predicated region
    $region6: #{tpu_custom_call.1} parent=1 // pred_check
      _
    $region7: #{tpu_custom_call.1} parent=1 // pred_check_branch
      %15 = sbr.rel (0) target = $region9
    $region8: #{tpu_custom_call.1} parent=1 // pred_region
      %s17 = ssub.s32 2048, 2048
      %18 = vsyncadd [#allocation3], %s17
      %s19 = sshll.u32 [#allocation2], 4
      %s20 = int_to_ptr.vmem [resolvable:$true] %s19
      %25 = dma.hbm_to_vmem [thread:$0]  %s1, 2048, %s20, [#allocation3], 128, 128, 8
    $region9: #{tpu_custom_call.1} parent=1 // pred_fallthru
      _
    // Predicated region
    $region10: #{tpu_custom_call.1} parent=1 // pred_check
      _
    $region11: #{tpu_custom_call.1} parent=1 // pred_check_branch
      %27 = sbr.rel (0) target = $region13
    $region12: #{tpu_custom_call.1} parent=1 // pred_region
      _
    $region13: #{tpu_custom_call.1} parent=1 // pred_fallthru
      _
    // Predicated region
    $region14: #{tpu_custom_call.1} parent=1 // pred_check
      _
    $region15: #{tpu_custom_call.1} parent=1 // pred_check_branch
      %29 = sbr.rel (0) target = $region17
    $region16: #{tpu_custom_call.1} parent=1 // pred_region
      _
    $region17: #{tpu_custom_call.1} parent=1 // pred_fallthru
      _
    // Predicated region
    $region18: #{tpu_custom_call.1} parent=1 // pred_check
      _
    $region19: #{tpu_custom_call.1} parent=1 // pred_check_branch
      %31 = sbr.rel (0) target = $region21
    $region20: #{tpu_custom_call.1} parent=1 // pred_region
      _
    $region21: #{tpu_custom_call.1} parent=1 // pred_fallthru
      _
    // Predicated region
    $region22: #{tpu_custom_call.1} parent=1 // pred_check
      _
    $region23: #{tpu_custom_call.1} parent=1 // pred_check_branch
      %33 = sbr.rel (0) target = $region25
    $region24: #{tpu_custom_call.1} parent=1 // pred_region
      %34 = dma.done [#allocation3], 2048
    $region25: #{tpu_custom_call.1} parent=1 // pred_fallthru
      _
    %v35 = vld [vmem:[%s0] sm:$0xff]
    %v36 = vld [vmem:[%s0 + $0x8] sm:$0xff]
    %v37 = vld [vmem:[%s0 + $0x10] sm:$0xff]
    %v38 = vld [vmem:[%s0 + $0x18] sm:$0xff]
    %v39 = vld [vmem:[%s0 + $0x20] sm:$0xff]
    %v40 = vld [vmem:[%s0 + $0x28] sm:$0xff]
    %v41 = vld [vmem:[%s0 + $0x30] sm:$0xff]
    %v42 = vld [vmem:[%s0 + $0x38] sm:$0xff]
    %v43 = vld [vmem:[%s0 + $0x40] sm:$0xff]
    %v44 = vld [vmem:[%s0 + $0x48] sm:$0xff]
    %v45 = vld [vmem:[%s0 + $0x50] sm:$0xff]
    %v46 = vld [vmem:[%s0 + $0x58] sm:$0xff]
    %v47 = vld [vmem:[%s0 + $0x60] sm:$0xff]
    %v48 = vld [vmem:[%s0 + $0x68] sm:$0xff]
    %v49 = vld [vmem:[%s0 + $0x70] sm:$0xff]
    %v50 = vld [vmem:[%s0 + $0x78] sm:$0xff]
    %v51 = vld [vmem:[%s2] sm:$0xff]
    %v52 = vld [vmem:[%s2 + $0x8] sm:$0xff]
    %v53 = vld [vmem:[%s2 + $0x10] sm:$0xff]
    %v54 = vld [vmem:[%s2 + $0x18] sm:$0xff]
    %v55 = vld [vmem:[%s2 + $0x20] sm:$0xff]
    %v56 = vld [vmem:[%s2 + $0x28] sm:$0xff]
    %v57 = vld [vmem:[%s2 + $0x30] sm:$0xff]
    %v58 = vld [vmem:[%s2 + $0x38] sm:$0xff]
    %v59 = vld [vmem:[%s2 + $0x40] sm:$0xff]
    %v60 = vld [vmem:[%s2 + $0x48] sm:$0xff]
    %v61 = vld [vmem:[%s2 + $0x50] sm:$0xff]
    %v62 = vld [vmem:[%s2 + $0x58] sm:$0xff]
    %v63 = vld [vmem:[%s2 + $0x60] sm:$0xff]
    %v64 = vld [vmem:[%s2 + $0x68] sm:$0xff]
    %v65 = vld [vmem:[%s2 + $0x70] sm:$0xff]
    %v66 = vld [vmem:[%s2 + $0x78] sm:$0xff]
    %68 = vset.pattern.permute.xlu0 0
    %69 = vperm.xlu0 %68, %v51
    %v70 = vpop.permute.xlu0 %69
    %73 = vset.pattern.permute.xlu0 0
    %74 = vperm.xlu0 %73, %v52
    %v75 = vpop.permute.xlu0 %74
    %78 = vset.pattern.permute.xlu0 0
    %79 = vperm.xlu0 %78, %v53
    %v80 = vpop.permute.xlu0 %79
    %83 = vset.pattern.permute.xlu0 0
    %84 = vperm.xlu0 %83, %v54
    %v85 = vpop.permute.xlu0 %84
    %88 = vset.pattern.permute.xlu0 0
    %89 = vperm.xlu0 %88, %v55
    %v90 = vpop.permute.xlu0 %89
    %93 = vset.pattern.permute.xlu0 0
    %94 = vperm.xlu0 %93, %v56
    %v95 = vpop.permute.xlu0 %94
    %98 = vset.pattern.permute.xlu0 0
    %99 = vperm.xlu0 %98, %v57
    %v100 = vpop.permute.xlu0 %99
    %103 = vset.pattern.permute.xlu0 0
    %104 = vperm.xlu0 %103, %v58
    %v105 = vpop.permute.xlu0 %104
    %108 = vset.pattern.permute.xlu0 0
    %109 = vperm.xlu0 %108, %v59
    %v110 = vpop.permute.xlu0 %109
    %113 = vset.pattern.permute.xlu0 0
    %114 = vperm.xlu0 %113, %v60
    %v115 = vpop.permute.xlu0 %114
    %118 = vset.pattern.permute.xlu0 0
    %119 = vperm.xlu0 %118, %v61
    %v120 = vpop.permute.xlu0 %119
    %123 = vset.pattern.permute.xlu0 0
    %124 = vperm.xlu0 %123, %v62
    %v125 = vpop.permute.xlu0 %124
    %128 = vset.pattern.permute.xlu0 0
    %129 = vperm.xlu0 %128, %v63
    %v130 = vpop.permute.xlu0 %129
    %133 = vset.pattern.permute.xlu0 0
    %134 = vperm.xlu0 %133, %v64
    %v135 = vpop.permute.xlu0 %134
    %138 = vset.pattern.permute.xlu0 0
    %139 = vperm.xlu0 %138, %v65
    %v140 = vpop.permute.xlu0 %139
    %143 = vset.pattern.permute.xlu0 0
    %144 = vperm.xlu0 %143, %v66
    %v145 = vpop.permute.xlu0 %144
    %v147 = vmul.f32 %v35, %v70
    %v148 = vmul.f32 %v36, %v75
    %v149 = vmul.f32 %v37, %v80
    %v150 = vmul.f32 %v38, %v85
    %v151 = vmul.f32 %v39, %v90
    %v152 = vmul.f32 %v40, %v95
    %v153 = vmul.f32 %v41, %v100
    %v154 = vmul.f32 %v42, %v105
    %v155 = vmul.f32 %v43, %v110
    %v156 = vmul.f32 %v44, %v115
    %v157 = vmul.f32 %v45, %v120
    %v158 = vmul.f32 %v46, %v125
    %v159 = vmul.f32 %v47, %v130
    %v160 = vmul.f32 %v48, %v135
    %v161 = vmul.f32 %v49, %v140
    %v162 = vmul.f32 %v50, %v145
    %v163 = vld [vmem:[%s3] sm:$0x1]
    %v165 = vlaneseq
    %v166 = vshrl.u32 %v165, 7
    %v167 = vsub.s32 0, %v166
    %v168 = vrot.slane %v163, %v167
    %v170 = vmul.f32 %v147, %v168
    %v171 = vmul.f32 %v148, %v168
    %v172 = vmul.f32 %v149, %v168
    %v173 = vmul.f32 %v150, %v168
    %v174 = vmul.f32 %v151, %v168
    %v175 = vmul.f32 %v152, %v168
    %v176 = vmul.f32 %v153, %v168
    %v177 = vmul.f32 %v154, %v168
    %v178 = vmul.f32 %v155, %v168
    %v179 = vmul.f32 %v156, %v168
    %v180 = vmul.f32 %v157, %v168
    %v181 = vmul.f32 %v158, %v168
    %v182 = vmul.f32 %v159, %v168
    %v183 = vmul.f32 %v160, %v168
    %v184 = vmul.f32 %v161, %v168
    %v185 = vmul.f32 %v162, %v168
    %v186 = vld [vmem:[#allocation2] sm:$0xff]
    %v187 = vld [vmem:[#allocation2 + $0x8] sm:$0xff]
    %v188 = vld [vmem:[#allocation2 + $0x10] sm:$0xff]
    %v189 = vld [vmem:[#allocation2 + $0x18] sm:$0xff]
    %v190 = vld [vmem:[#allocation2 + $0x20] sm:$0xff]
    %v191 = vld [vmem:[#allocation2 + $0x28] sm:$0xff]
    %v192 = vld [vmem:[#allocation2 + $0x30] sm:$0xff]
    %v193 = vld [vmem:[#allocation2 + $0x38] sm:$0xff]
    %v194 = vld [vmem:[#allocation2 + $0x40] sm:$0xff]
    %v195 = vld [vmem:[#allocation2 + $0x48] sm:$0xff]
    %v196 = vld [vmem:[#allocation2 + $0x50] sm:$0xff]
    %v197 = vld [vmem:[#allocation2 + $0x58] sm:$0xff]
    %v198 = vld [vmem:[#allocation2 + $0x60] sm:$0xff]
    %v199 = vld [vmem:[#allocation2 + $0x68] sm:$0xff]
    %v200 = vld [vmem:[#allocation2 + $0x70] sm:$0xff]
    %v201 = vld [vmem:[#allocation2 + $0x78] sm:$0xff]
    %v202 = vld [vmem:[%s4] sm:$0x1]
    %v204 = vlaneseq
    %v205 = vshrl.u32 %v204, 7
    %v206 = vsub.s32 0, %v205
    %v207 = vrot.slane %v202, %v206
    %v209 = vmul.f32 %v186, %v207
    %v210 = vmul.f32 %v187, %v207
    %v211 = vmul.f32 %v188, %v207
    %v212 = vmul.f32 %v189, %v207
    %v213 = vmul.f32 %v190, %v207
    %v214 = vmul.f32 %v191, %v207
    %v215 = vmul.f32 %v192, %v207
    %v216 = vmul.f32 %v193, %v207
    %v217 = vmul.f32 %v194, %v207
    %v218 = vmul.f32 %v195, %v207
    %v219 = vmul.f32 %v196, %v207
    %v220 = vmul.f32 %v197, %v207
    %v221 = vmul.f32 %v198, %v207
    %v222 = vmul.f32 %v199, %v207
    %v223 = vmul.f32 %v200, %v207
    %v224 = vmul.f32 %v201, %v207
    %225 = vadd.xlane.f32.xlu0 %v209
    %v226 = vpop.xlane.xlu0 %225
    %227 = vadd.xlane.f32.xlu0 %v210
    %v228 = vpop.xlane.xlu0 %227
    %229 = vadd.xlane.f32.xlu0 %v211
    %v230 = vpop.xlane.xlu0 %229
    %231 = vadd.xlane.f32.xlu0 %v212
    %v232 = vpop.xlane.xlu0 %231
    %233 = vadd.xlane.f32.xlu0 %v213
    %v234 = vpop.xlane.xlu0 %233
    %235 = vadd.xlane.f32.xlu0 %v214
    %v236 = vpop.xlane.xlu0 %235
    %237 = vadd.xlane.f32.xlu0 %v215
    %v238 = vpop.xlane.xlu0 %237
    %239 = vadd.xlane.f32.xlu0 %v216
    %v240 = vpop.xlane.xlu0 %239
    %241 = vadd.xlane.f32.xlu0 %v217
    %v242 = vpop.xlane.xlu0 %241
    %243 = vadd.xlane.f32.xlu0 %v218
    %v244 = vpop.xlane.xlu0 %243
    %245 = vadd.xlane.f32.xlu0 %v219
    %v246 = vpop.xlane.xlu0 %245
    %247 = vadd.xlane.f32.xlu0 %v220
    %v248 = vpop.xlane.xlu0 %247
    %249 = vadd.xlane.f32.xlu0 %v221
    %v250 = vpop.xlane.xlu0 %249
    %251 = vadd.xlane.f32.xlu0 %v222
    %v252 = vpop.xlane.xlu0 %251
    %253 = vadd.xlane.f32.xlu0 %v223
    %v254 = vpop.xlane.xlu0 %253
    %255 = vadd.xlane.f32.xlu0 %v224
    %v256 = vpop.xlane.xlu0 %255
    %v257 = vxor.u32 %v226, 2147483648
    %v258 = vxor.u32 %v228, 2147483648
    %v259 = vxor.u32 %v230, 2147483648
    %v260 = vxor.u32 %v232, 2147483648
    %v261 = vxor.u32 %v234, 2147483648
    %v262 = vxor.u32 %v236, 2147483648
    %v263 = vxor.u32 %v238, 2147483648
    %v264 = vxor.u32 %v240, 2147483648
    %v265 = vxor.u32 %v242, 2147483648
    %v266 = vxor.u32 %v244, 2147483648
    %v267 = vxor.u32 %v246, 2147483648
    %v268 = vxor.u32 %v248, 2147483648
    %v269 = vxor.u32 %v250, 2147483648
    %v270 = vxor.u32 %v252, 2147483648
    %v271 = vxor.u32 %v254, 2147483648
    %v272 = vxor.u32 %v256, 2147483648
    %v273 = vmul.f32 %v257, 1.442695
    %v274 = vpow.pop %v273
    %v275 = vmul.f32 %v258, 1.442695
    %v276 = vpow.pop %v275
    %v277 = vmul.f32 %v259, 1.442695
    %v278 = vpow.pop %v277
    %v279 = vmul.f32 %v260, 1.442695
    %v280 = vpow.pop %v279
    %v281 = vmul.f32 %v261, 1.442695
    %v282 = vpow.pop %v281
    %v283 = vmul.f32 %v262, 1.442695
    %v284 = vpow.pop %v283
    %v285 = vmul.f32 %v263, 1.442695
    %v286 = vpow.pop %v285
    %v287 = vmul.f32 %v264, 1.442695
    %v288 = vpow.pop %v287
    %v289 = vmul.f32 %v265, 1.442695
    %v290 = vpow.pop %v289
    %v291 = vmul.f32 %v266, 1.442695
    %v292 = vpow.pop %v291
    %v293 = vmul.f32 %v267, 1.442695
    %v294 = vpow.pop %v293
    %v295 = vmul.f32 %v268, 1.442695
    %v296 = vpow.pop %v295
    %v297 = vmul.f32 %v269, 1.442695
    %v298 = vpow.pop %v297
    %v299 = vmul.f32 %v270, 1.442695
    %v300 = vpow.pop %v299
    %v301 = vmul.f32 %v271, 1.442695
    %v302 = vpow.pop %v301
    %v303 = vmul.f32 %v272, 1.442695
    %v304 = vpow.pop %v303
    %v305 = vadd.f32 %v274, 1.0
    %v306 = vadd.f32 %v276, 1.0
    %v307 = vadd.f32 %v278, 1.0
    %v308 = vadd.f32 %v280, 1.0
    %v309 = vadd.f32 %v282, 1.0
    %v310 = vadd.f32 %v284, 1.0
    %v311 = vadd.f32 %v286, 1.0
    %v312 = vadd.f32 %v288, 1.0
    %v313 = vadd.f32 %v290, 1.0
    %v314 = vadd.f32 %v292, 1.0
    %v315 = vadd.f32 %v294, 1.0
    %v316 = vadd.f32 %v296, 1.0
    %v317 = vadd.f32 %v298, 1.0
    %v318 = vadd.f32 %v300, 1.0
    %v319 = vadd.f32 %v302, 1.0
    %v320 = vadd.f32 %v304, 1.0
    %v321 = vrcp.pop %v305
    %v322 = vmul.f32 1.0, %v321
    %v323 = vrcp.pop %v306
    %v324 = vmul.f32 1.0, %v323
    %v325 = vrcp.pop %v307
    %v326 = vmul.f32 1.0, %v325
    %v327 = vrcp.pop %v308
    %v328 = vmul.f32 1.0, %v327
    %v329 = vrcp.pop %v309
    %v330 = vmul.f32 1.0, %v329
    %v331 = vrcp.pop %v310
    %v332 = vmul.f32 1.0, %v331
    %v333 = vrcp.pop %v311
    %v334 = vmul.f32 1.0, %v333
    %v335 = vrcp.pop %v312
    %v336 = vmul.f32 1.0, %v335
    %v337 = vrcp.pop %v313
    %v338 = vmul.f32 1.0, %v337
    %v339 = vrcp.pop %v314
    %v340 = vmul.f32 1.0, %v339
    %v341 = vrcp.pop %v315
    %v342 = vmul.f32 1.0, %v341
    %v343 = vrcp.pop %v316
    %v344 = vmul.f32 1.0, %v343
    %v345 = vrcp.pop %v317
    %v346 = vmul.f32 1.0, %v345
    %v347 = vrcp.pop %v318
    %v348 = vmul.f32 1.0, %v347
    %v349 = vrcp.pop %v319
    %v350 = vmul.f32 1.0, %v349
    %v351 = vrcp.pop %v320
    %v352 = vmul.f32 1.0, %v351
    %v353 = vmul.f32 %v322, %v186
    %v354 = vmul.f32 %v324, %v187
    %v355 = vmul.f32 %v326, %v188
    %v356 = vmul.f32 %v328, %v189
    %v357 = vmul.f32 %v330, %v190
    %v358 = vmul.f32 %v332, %v191
    %v359 = vmul.f32 %v334, %v192
    %v360 = vmul.f32 %v336, %v193
    %v361 = vmul.f32 %v338, %v194
    %v362 = vmul.f32 %v340, %v195
    %v363 = vmul.f32 %v342, %v196
    %v364 = vmul.f32 %v344, %v197
    %v365 = vmul.f32 %v346, %v198
    %v366 = vmul.f32 %v348, %v199
    %v367 = vmul.f32 %v350, %v200
    %v368 = vmul.f32 %v352, %v201
    %369 = vmatprep.subr.mxu0 0.0
    %370 = vmatpush1.msra.mxu0 %v201
    %371 = vmatprep.subr.mxu0 0.0
    %372 = vmatpush1.msra.mxu0 %v200
    %373 = vmatprep.subr.mxu0 0.0
    %374 = vmatpush1.msra.mxu0 %v199
    %375 = vmatprep.subr.mxu0 0.0
    %376 = vmatpush1.msra.mxu0 %v198
    %377 = vmatprep.subr.mxu0 0.0
    %378 = vmatpush1.msra.mxu0 %v197
    %379 = vmatprep.subr.mxu0 0.0
    %380 = vmatpush1.msra.mxu0 %v196
    %381 = vmatprep.subr.mxu0 0.0
    %382 = vmatpush1.msra.mxu0 %v195
    %383 = vmatprep.subr.mxu0 0.0
    %384 = vmatpush1.msra.mxu0 %v194
    %385 = vmatprep.subr.mxu0 0.0
    %386 = vmatpush1.msra.mxu0 %v193
    %387 = vmatprep.subr.mxu0 0.0
    %388 = vmatpush1.msra.mxu0 %v192
    %389 = vmatprep.subr.mxu0 0.0
    %390 = vmatpush1.msra.mxu0 %v191
    %391 = vmatprep.subr.mxu0 0.0
    %392 = vmatpush1.msra.mxu0 %v190
    %393 = vmatprep.subr.mxu0 0.0
    %394 = vmatpush1.msra.mxu0 %v189
    %395 = vmatprep.subr.mxu0 0.0
    %396 = vmatpush1.msra.mxu0 %v188
    %397 = vmatprep.subr.mxu0 0.0
    %398 = vmatpush1.msra.mxu0 %v187
    %399 = vmatprep.subr.mxu0 0.0
    %400 = vmatpush1.msra.mxu0 %v186
    %401 = vmatprep.subr.mxu0 0.0
    %402 = vmatpush2.msra.mxu0 0.0
    %403 = vmatprep.subr.mxu0 0.0
    %404 = vmatpush2.msra.mxu0 0.0
    %405 = vmatprep.subr.mxu0 0.0
    %406 = vmatpush2.msra.mxu0 0.0
    %407 = vmatprep.subr.mxu0 0.0
    %408 = vmatpush2.msra.mxu0 0.0
    %409 = vmatprep.subr.mxu0 0.0
    %410 = vmatpush2.msra.mxu0 0.0
    %411 = vmatprep.subr.mxu0 0.0
    %412 = vmatpush2.msra.mxu0 0.0
    %413 = vmatprep.subr.mxu0 0.0
    %414 = vmatpush2.msra.mxu0 0.0
    %415 = vmatprep.subr.mxu0 0.0
    %416 = vmatpush2.msra.mxu0 0.0
    %417 = vmatprep.subr.mxu0 0.0
    %418 = vmatpush2.msra.mxu0 0.0
    %419 = vmatprep.subr.mxu0 0.0
    %420 = vmatpush2.msra.mxu0 0.0
    %421 = vmatprep.subr.mxu0 0.0
    %422 = vmatpush2.msra.mxu0 0.0
    %423 = vmatprep.subr.mxu0 0.0
    %424 = vmatpush2.msra.mxu0 0.0
    %425 = vmatprep.subr.mxu0 0.0
    %426 = vmatpush2.msra.mxu0 0.0
    %427 = vmatprep.subr.mxu0 0.0
    %428 = vmatpush2.msra.mxu0 0.0
    %429 = vmatprep.subr.mxu0 0.0
    %430 = vmatpush2.msra.mxu0 0.0
    %431 = vmatprep.subr.mxu0 0.0
    %432 = vmatpush2.msra.mxu0 0.0
    %433 = vmatprep.mubr.f32.mxu0 0.0
    %434 = vmatmul.mubr.f32.gmra.mxu0 %v170
    %v435 = vpop.f32.mrf.mxu0
    %v436 = vadd.f32 0.0, %v435
    %v437 = vpop.f32.mrf.mxu0
    %438 = vmatprep.mubr.f32.mxu0 0.0
    %439 = vmatmul.mubr.f32.gmra.mxu0 %v171
    %v440 = vpop.f32.mrf.mxu0
    %v441 = vadd.f32 0.0, %v440
    %v442 = vpop.f32.mrf.mxu0
    %443 = vmatprep.mubr.f32.mxu0 0.0
    %444 = vmatmul.mubr.f32.gmra.mxu0 %v172
    %v445 = vpop.f32.mrf.mxu0
    %v446 = vadd.f32 0.0, %v445
    %v447 = vpop.f32.mrf.mxu0
    %448 = vmatprep.mubr.f32.mxu0 0.0
    %449 = vmatmul.mubr.f32.gmra.mxu0 %v173
    %v450 = vpop.f32.mrf.mxu0
    %v451 = vadd.f32 0.0, %v450
    %v452 = vpop.f32.mrf.mxu0
    %453 = vmatprep.mubr.f32.mxu0 0.0
    %454 = vmatmul.mubr.f32.gmra.mxu0 %v174
    %v455 = vpop.f32.mrf.mxu0
    %v456 = vadd.f32 0.0, %v455
    %v457 = vpop.f32.mrf.mxu0
    %458 = vmatprep.mubr.f32.mxu0 0.0
    %459 = vmatmul.mubr.f32.gmra.mxu0 %v175
    %v460 = vpop.f32.mrf.mxu0
    %v461 = vadd.f32 0.0, %v460
    %v462 = vpop.f32.mrf.mxu0
    %463 = vmatprep.mubr.f32.mxu0 0.0
    %464 = vmatmul.mubr.f32.gmra.mxu0 %v176
    %v465 = vpop.f32.mrf.mxu0
    %v466 = vadd.f32 0.0, %v465
    %v467 = vpop.f32.mrf.mxu0
    %468 = vmatprep.mubr.f32.mxu0 0.0
    %469 = vmatmul.mubr.f32.gmra.mxu0 %v177
    %v470 = vpop.f32.mrf.mxu0
    %v471 = vadd.f32 0.0, %v470
    %v472 = vpop.f32.mrf.mxu0
    %473 = vmatprep.mubr.f32.mxu0 0.0
    %474 = vmatmul.mubr.f32.gmra.mxu0 %v178
    %v475 = vpop.f32.mrf.mxu0
    %v476 = vadd.f32 0.0, %v475
    %v477 = vpop.f32.mrf.mxu0
    %478 = vmatprep.mubr.f32.mxu0 0.0
    %479 = vmatmul.mubr.f32.gmra.mxu0 %v179
    %v480 = vpop.f32.mrf.mxu0
    %v481 = vadd.f32 0.0, %v480
    %v482 = vpop.f32.mrf.mxu0
    %483 = vmatprep.mubr.f32.mxu0 0.0
    %484 = vmatmul.mubr.f32.gmra.mxu0 %v180
    %v485 = vpop.f32.mrf.mxu0
    %v486 = vadd.f32 0.0, %v485
    %v487 = vpop.f32.mrf.mxu0
    %488 = vmatprep.mubr.f32.mxu0 0.0
    %489 = vmatmul.mubr.f32.gmra.mxu0 %v181
    %v490 = vpop.f32.mrf.mxu0
    %v491 = vadd.f32 0.0, %v490
    %v492 = vpop.f32.mrf.mxu0
    %493 = vmatprep.mubr.f32.mxu0 0.0
    %494 = vmatmul.mubr.f32.gmra.mxu0 %v182
    %v495 = vpop.f32.mrf.mxu0
    %v496 = vadd.f32 0.0, %v495
    %v497 = vpop.f32.mrf.mxu0
    %498 = vmatprep.mubr.f32.mxu0 0.0
    %499 = vmatmul.mubr.f32.gmra.mxu0 %v183
    %v500 = vpop.f32.mrf.mxu0
    %v501 = vadd.f32 0.0, %v500
    %v502 = vpop.f32.mrf.mxu0
    %503 = vmatprep.mubr.f32.mxu0 0.0
    %504 = vmatmul.mubr.f32.gmra.mxu0 %v184
    %v505 = vpop.f32.mrf.mxu0
    %v506 = vadd.f32 0.0, %v505
    %v507 = vpop.f32.mrf.mxu0
    %508 = vmatprep.mubr.f32.mxu0 0.0
    %509 = vmatmul.mubr.f32.gmra.mxu0 %v185
    %v510 = vpop.f32.mrf.mxu0
    %v511 = vadd.f32 0.0, %v510
    %v512 = vpop.f32.mrf.mxu0
    %513 = vdwg.mxu0
    %v514 = vmul.f32 %v436, %v207
    %v515 = vmul.f32 %v441, %v207
    %v516 = vmul.f32 %v446, %v207
    %v517 = vmul.f32 %v451, %v207
    %v518 = vmul.f32 %v456, %v207
    %v519 = vmul.f32 %v461, %v207
    %v520 = vmul.f32 %v466, %v207
    %v521 = vmul.f32 %v471, %v207
    %v522 = vmul.f32 %v476, %v207
    %v523 = vmul.f32 %v481, %v207
    %v524 = vmul.f32 %v486, %v207
    %v525 = vmul.f32 %v491, %v207
    %v526 = vmul.f32 %v496, %v207
    %v527 = vmul.f32 %v501, %v207
    %v528 = vmul.f32 %v506, %v207
    %v529 = vmul.f32 %v511, %v207
    %530 = vadd.xlane.f32.xlu0 %v514
    %v531 = vpop.xlane.xlu0 %530
    %532 = vadd.xlane.f32.xlu0 %v515
    %v533 = vpop.xlane.xlu0 %532
    %534 = vadd.xlane.f32.xlu0 %v516
    %v535 = vpop.xlane.xlu0 %534
    %536 = vadd.xlane.f32.xlu0 %v517
    %v537 = vpop.xlane.xlu0 %536
    %538 = vadd.xlane.f32.xlu0 %v518
    %v539 = vpop.xlane.xlu0 %538
    %540 = vadd.xlane.f32.xlu0 %v519
    %v541 = vpop.xlane.xlu0 %540
    %542 = vadd.xlane.f32.xlu0 %v520
    %v543 = vpop.xlane.xlu0 %542
    %544 = vadd.xlane.f32.xlu0 %v521
    %v545 = vpop.xlane.xlu0 %544
    %546 = vadd.xlane.f32.xlu0 %v522
    %v547 = vpop.xlane.xlu0 %546
    %548 = vadd.xlane.f32.xlu0 %v523
    %v549 = vpop.xlane.xlu0 %548
    %550 = vadd.xlane.f32.xlu0 %v524
    %v551 = vpop.xlane.xlu0 %550
    %552 = vadd.xlane.f32.xlu0 %v525
    %v553 = vpop.xlane.xlu0 %552
    %554 = vadd.xlane.f32.xlu0 %v526
    %v555 = vpop.xlane.xlu0 %554
    %556 = vadd.xlane.f32.xlu0 %v527
    %v557 = vpop.xlane.xlu0 %556
    %558 = vadd.xlane.f32.xlu0 %v528
    %v559 = vpop.xlane.xlu0 %558
    %560 = vadd.xlane.f32.xlu0 %v529
    %v561 = vpop.xlane.xlu0 %560
    %v562 = vxor.u32 %v531, 2147483648
    %v563 = vxor.u32 %v533, 2147483648
    %v564 = vxor.u32 %v535, 2147483648
    %v565 = vxor.u32 %v537, 2147483648
    %v566 = vxor.u32 %v539, 2147483648
    %v567 = vxor.u32 %v541, 2147483648
    %v568 = vxor.u32 %v543, 2147483648
    %v569 = vxor.u32 %v545, 2147483648
    %v570 = vxor.u32 %v547, 2147483648
    %v571 = vxor.u32 %v549, 2147483648
    %v572 = vxor.u32 %v551, 2147483648
    %v573 = vxor.u32 %v553, 2147483648
    %v574 = vxor.u32 %v555, 2147483648
    %v575 = vxor.u32 %v557, 2147483648
    %v576 = vxor.u32 %v559, 2147483648
    %v577 = vxor.u32 %v561, 2147483648
    %v578 = vmul.f32 %v562, 1.442695
    %v579 = vpow.pop %v578
    %v580 = vmul.f32 %v563, 1.442695
    %v581 = vpow.pop %v580
    %v582 = vmul.f32 %v564, 1.442695
    %v583 = vpow.pop %v582
    %v584 = vmul.f32 %v565, 1.442695
    %v585 = vpow.pop %v584
    %v586 = vmul.f32 %v566, 1.442695
    %v587 = vpow.pop %v586
    %v588 = vmul.f32 %v567, 1.442695
    %v589 = vpow.pop %v588
    %v590 = vmul.f32 %v568, 1.442695
    %v591 = vpow.pop %v590
    %v592 = vmul.f32 %v569, 1.442695
    %v593 = vpow.pop %v592
    %v594 = vmul.f32 %v570, 1.442695
    %v595 = vpow.pop %v594
    %v596 = vmul.f32 %v571, 1.442695
    %v597 = vpow.pop %v596
    %v598 = vmul.f32 %v572, 1.442695
    %v599 = vpow.pop %v598
    %v600 = vmul.f32 %v573, 1.442695
    %v601 = vpow.pop %v600
    %v602 = vmul.f32 %v574, 1.442695
    %v603 = vpow.pop %v602
    %v604 = vmul.f32 %v575, 1.442695
    %v605 = vpow.pop %v604
    %v606 = vmul.f32 %v576, 1.442695
    %v607 = vpow.pop %v606
    %v608 = vmul.f32 %v577, 1.442695
    %v609 = vpow.pop %v608
    %v610 = vadd.f32 %v579, 1.0
    %v611 = vadd.f32 %v581, 1.0
    %v612 = vadd.f32 %v583, 1.0
    %v613 = vadd.f32 %v585, 1.0
    %v614 = vadd.f32 %v587, 1.0
    %v615 = vadd.f32 %v589, 1.0
    %v616 = vadd.f32 %v591, 1.0
    %v617 = vadd.f32 %v593, 1.0
    %v618 = vadd.f32 %v595, 1.0
    %v619 = vadd.f32 %v597, 1.0
    %v620 = vadd.f32 %v599, 1.0
    %v621 = vadd.f32 %v601, 1.0
    %v622 = vadd.f32 %v603, 1.0
    %v623 = vadd.f32 %v605, 1.0
    %v624 = vadd.f32 %v607, 1.0
    %v625 = vadd.f32 %v609, 1.0
    %v626 = vrcp.pop %v610
    %v627 = vmul.f32 1.0, %v626
    %v628 = vrcp.pop %v611
    %v629 = vmul.f32 1.0, %v628
    %v630 = vrcp.pop %v612
    %v631 = vmul.f32 1.0, %v630
    %v632 = vrcp.pop %v613
    %v633 = vmul.f32 1.0, %v632
    %v634 = vrcp.pop %v614
    %v635 = vmul.f32 1.0, %v634
    %v636 = vrcp.pop %v615
    %v637 = vmul.f32 1.0, %v636
    %v638 = vrcp.pop %v616
    %v639 = vmul.f32 1.0, %v638
    %v640 = vrcp.pop %v617
    %v641 = vmul.f32 1.0, %v640
    %v642 = vrcp.pop %v618
    %v643 = vmul.f32 1.0, %v642
    %v644 = vrcp.pop %v619
    %v645 = vmul.f32 1.0, %v644
    %v646 = vrcp.pop %v620
    %v647 = vmul.f32 1.0, %v646
    %v648 = vrcp.pop %v621
    %v649 = vmul.f32 1.0, %v648
    %v650 = vrcp.pop %v622
    %v651 = vmul.f32 1.0, %v650
    %v652 = vrcp.pop %v623
    %v653 = vmul.f32 1.0, %v652
    %v654 = vrcp.pop %v624
    %v655 = vmul.f32 1.0, %v654
    %v656 = vrcp.pop %v625
    %v657 = vmul.f32 1.0, %v656
    %v658 = vmul.f32 %v627, %v436
    %v659 = vmul.f32 %v629, %v441
    %v660 = vmul.f32 %v631, %v446
    %v661 = vmul.f32 %v633, %v451
    %v662 = vmul.f32 %v635, %v456
    %v663 = vmul.f32 %v637, %v461
    %v664 = vmul.f32 %v639, %v466
    %v665 = vmul.f32 %v641, %v471
    %v666 = vmul.f32 %v643, %v476
    %v667 = vmul.f32 %v645, %v481
    %v668 = vmul.f32 %v647, %v486
    %v669 = vmul.f32 %v649, %v491
    %v670 = vmul.f32 %v651, %v496
    %v671 = vmul.f32 %v653, %v501
    %v672 = vmul.f32 %v655, %v506
    %v673 = vmul.f32 %v657, %v511
    %v674 = vadd.f32 %v353, %v658
    %v675 = vadd.f32 %v354, %v659
    %v676 = vadd.f32 %v355, %v660
    %v677 = vadd.f32 %v356, %v661
    %v678 = vadd.f32 %v357, %v662
    %v679 = vadd.f32 %v358, %v663
    %v680 = vadd.f32 %v359, %v664
    %v681 = vadd.f32 %v360, %v665
    %v682 = vadd.f32 %v361, %v666
    %v683 = vadd.f32 %v362, %v667
    %v684 = vadd.f32 %v363, %v668
    %v685 = vadd.f32 %v364, %v669
    %v686 = vadd.f32 %v365, %v670
    %v687 = vadd.f32 %v366, %v671
    %v688 = vadd.f32 %v367, %v672
    %v689 = vadd.f32 %v368, %v673
    %690 = vmatprep.subr.mxu0 0.0
    %691 = vmatpush1.msra.mxu0 %v511
    %692 = vmatprep.subr.mxu0 0.0
    %693 = vmatpush1.msra.mxu0 %v506
    %694 = vmatprep.subr.mxu0 0.0
    %695 = vmatpush1.msra.mxu0 %v501
    %696 = vmatprep.subr.mxu0 0.0
    %697 = vmatpush1.msra.mxu0 %v496
    %698 = vmatprep.subr.mxu0 0.0
    %699 = vmatpush1.msra.mxu0 %v491
    %700 = vmatprep.subr.mxu0 0.0
    %701 = vmatpush1.msra.mxu0 %v486
    %702 = vmatprep.subr.mxu0 0.0
    %703 = vmatpush1.msra.mxu0 %v481
    %704 = vmatprep.subr.mxu0 0.0
    %705 = vmatpush1.msra.mxu0 %v476
    %706 = vmatprep.subr.mxu0 0.0
    %707 = vmatpush1.msra.mxu0 %v471
    %708 = vmatprep.subr.mxu0 0.0
    %709 = vmatpush1.msra.mxu0 %v466
    %710 = vmatprep.subr.mxu0 0.0
    %711 = vmatpush1.msra.mxu0 %v461
    %712 = vmatprep.subr.mxu0 0.0
    %713 = vmatpush1.msra.mxu0 %v456
    %714 = vmatprep.subr.mxu0 0.0
    %715 = vmatpush1.msra.mxu0 %v451
    %716 = vmatprep.subr.mxu0 0.0
    %717 = vmatpush1.msra.mxu0 %v446
    %718 = vmatprep.subr.mxu0 0.0
    %719 = vmatpush1.msra.mxu0 %v441
    %720 = vmatprep.subr.mxu0 0.0
    %721 = vmatpush1.msra.mxu0 %v436
    %722 = vmatprep.subr.mxu0 0.0
    %723 = vmatpush2.msra.mxu0 0.0
    %724 = vmatprep.subr.mxu0 0.0
    %725 = vmatpush2.msra.mxu0 0.0
    %726 = vmatprep.subr.mxu0 0.0
    %727 = vmatpush2.msra.mxu0 0.0
    %728 = vmatprep.subr.mxu0 0.0
    %729 = vmatpush2.msra.mxu0 0.0
    %730 = vmatprep.subr.mxu0 0.0
    %731 = vmatpush2.msra.mxu0 0.0
    %732 = vmatprep.subr.mxu0 0.0
    %733 = vmatpush2.msra.mxu0 0.0
    %734 = vmatprep.subr.mxu0 0.0
    %735 = vmatpush2.msra.mxu0 0.0
    %736 = vmatprep.subr.mxu0 0.0
    %737 = vmatpush2.msra.mxu0 0.0
    %738 = vmatprep.subr.mxu0 0.0
    %739 = vmatpush2.msra.mxu0 0.0
    %740 = vmatprep.subr.mxu0 0.0
    %741 = vmatpush2.msra.mxu0 0.0
    %742 = vmatprep.subr.mxu0 0.0
    %743 = vmatpush2.msra.mxu0 0.0
    %744 = vmatprep.subr.mxu0 0.0
    %745 = vmatpush2.msra.mxu0 0.0
    %746 = vmatprep.subr.mxu0 0.0
    %747 = vmatpush2.msra.mxu0 0.0
    %748 = vmatprep.subr.mxu0 0.0
    %749 = vmatpush2.msra.mxu0 0.0
    %750 = vmatprep.subr.mxu0 0.0
    %751 = vmatpush2.msra.mxu0 0.0
    %752 = vmatprep.subr.mxu0 0.0
    %753 = vmatpush2.msra.mxu0 0.0
    %754 = vmatprep.mubr.f32.mxu0 0.0
    %755 = vmatmul.mubr.f32.gmra.mxu0 %v170
    %v756 = vpop.f32.mrf.mxu0
    %v757 = vadd.f32 0.0, %v756
    %v758 = vpop.f32.mrf.mxu0
    %759 = vmatprep.mubr.f32.mxu0 0.0
    %760 = vmatmul.mubr.f32.gmra.mxu0 %v171
    %v761 = vpop.f32.mrf.mxu0
    %v762 = vadd.f32 0.0, %v761
    %v763 = vpop.f32.mrf.mxu0
    %764 = vmatprep.mubr.f32.mxu0 0.0
    %765 = vmatmul.mubr.f32.gmra.mxu0 %v172
    %v766 = vpop.f32.mrf.mxu0
    %v767 = vadd.f32 0.0, %v766
    %v768 = vpop.f32.mrf.mxu0
    %769 = vmatprep.mubr.f32.mxu0 0.0
    %770 = vmatmul.mubr.f32.gmra.mxu0 %v173
    %v771 = vpop.f32.mrf.mxu0
    %v772 = vadd.f32 0.0, %v771
    %v773 = vpop.f32.mrf.mxu0
    %774 = vmatprep.mubr.f32.mxu0 0.0
    %775 = vmatmul.mubr.f32.gmra.mxu0 %v174
    %v776 = vpop.f32.mrf.mxu0
    %v777 = vadd.f32 0.0, %v776
    %v778 = vpop.f32.mrf.mxu0
    %779 = vmatprep.mubr.f32.mxu0 0.0
    %780 = vmatmul.mubr.f32.gmra.mxu0 %v175
    %v781 = vpop.f32.mrf.mxu0
    %v782 = vadd.f32 0.0, %v781
    %v783 = vpop.f32.mrf.mxu0
    %784 = vmatprep.mubr.f32.mxu0 0.0
    %785 = vmatmul.mubr.f32.gmra.mxu0 %v176
    %v786 = vpop.f32.mrf.mxu0
    %v787 = vadd.f32 0.0, %v786
    %v788 = vpop.f32.mrf.mxu0
    %789 = vmatprep.mubr.f32.mxu0 0.0
    %790 = vmatmul.mubr.f32.gmra.mxu0 %v177
    %v791 = vpop.f32.mrf.mxu0
    %v792 = vadd.f32 0.0, %v791
    %v793 = vpop.f32.mrf.mxu0
    %794 = vmatprep.mubr.f32.mxu0 0.0
    %795 = vmatmul.mubr.f32.gmra.mxu0 %v178
    %v796 = vpop.f32.mrf.mxu0
    %v797 = vadd.f32 0.0, %v796
    %v798 = vpop.f32.mrf.mxu0
    %799 = vmatprep.mubr.f32.mxu0 0.0
    %800 = vmatmul.mubr.f32.gmra.mxu0 %v179
    %v801 = vpop.f32.mrf.mxu0
    %v802 = vadd.f32 0.0, %v801
    %v803 = vpop.f32.mrf.mxu0
    %804 = vmatprep.mubr.f32.mxu0 0.0
    %805 = vmatmul.mubr.f32.gmra.mxu0 %v180
    %v806 = vpop.f32.mrf.mxu0
    %v807 = vadd.f32 0.0, %v806
    %v808 = vpop.f32.mrf.mxu0
    %809 = vmatprep.mubr.f32.mxu0 0.0
    %810 = vmatmul.mubr.f32.gmra.mxu0 %v181
    %v811 = vpop.f32.mrf.mxu0
    %v812 = vadd.f32 0.0, %v811
    %v813 = vpop.f32.mrf.mxu0
    %814 = vmatprep.mubr.f32.mxu0 0.0
    %815 = vmatmul.mubr.f32.gmra.mxu0 %v182
    %v816 = vpop.f32.mrf.mxu0
    %v817 = vadd.f32 0.0, %v816
    %v818 = vpop.f32.mrf.mxu0
    %819 = vmatprep.mubr.f32.mxu0 0.0
    %820 = vmatmul.mubr.f32.gmra.mxu0 %v183
    %v821 = vpop.f32.mrf.mxu0
    %v822 = vadd.f32 0.0, %v821
    %v823 = vpop.f32.mrf.mxu0
    %824 = vmatprep.mubr.f32.mxu0 0.0
    %825 = vmatmul.mubr.f32.gmra.mxu0 %v184
    %v826 = vpop.f32.mrf.mxu0
    %v827 = vadd.f32 0.0, %v826
    %v828 = vpop.f32.mrf.mxu0
    %829 = vmatprep.mubr.f32.mxu0 0.0
    %830 = vmatmul.mubr.f32.gmra.mxu0 %v185
    %v831 = vpop.f32.mrf.mxu0
    %v832 = vadd.f32 0.0, %v831
    %v833 = vpop.f32.mrf.mxu0
    %834 = vdwg.mxu0
    %v835 = vmul.f32 %v757, %v207
    %v836 = vmul.f32 %v762, %v207
    %v837 = vmul.f32 %v767, %v207
    %v838 = vmul.f32 %v772, %v207
    %v839 = vmul.f32 %v777, %v207
    %v840 = vmul.f32 %v782, %v207
    %v841 = vmul.f32 %v787, %v207
    %v842 = vmul.f32 %v792, %v207
    %v843 = vmul.f32 %v797, %v207
    %v844 = vmul.f32 %v802, %v207
    %v845 = vmul.f32 %v807, %v207
    %v846 = vmul.f32 %v812, %v207
    %v847 = vmul.f32 %v817, %v207
    %v848 = vmul.f32 %v822, %v207
    %v849 = vmul.f32 %v827, %v207
    %v850 = vmul.f32 %v832, %v207
    %851 = vadd.xlane.f32.xlu0 %v835
    %v852 = vpop.xlane.xlu0 %851
    %853 = vadd.xlane.f32.xlu0 %v836
    %v854 = vpop.xlane.xlu0 %853
    %855 = vadd.xlane.f32.xlu0 %v837
    %v856 = vpop.xlane.xlu0 %855
    %857 = vadd.xlane.f32.xlu0 %v838
    %v858 = vpop.xlane.xlu0 %857
    %859 = vadd.xlane.f32.xlu0 %v839
    %v860 = vpop.xlane.xlu0 %859
    %861 = vadd.xlane.f32.xlu0 %v840
    %v862 = vpop.xlane.xlu0 %861
    %863 = vadd.xlane.f32.xlu0 %v841
    %v864 = vpop.xlane.xlu0 %863
    %865 = vadd.xlane.f32.xlu0 %v842
    %v866 = vpop.xlane.xlu0 %865
    %867 = vadd.xlane.f32.xlu0 %v843
    %v868 = vpop.xlane.xlu0 %867
    %869 = vadd.xlane.f32.xlu0 %v844
    %v870 = vpop.xlane.xlu0 %869
    %871 = vadd.xlane.f32.xlu0 %v845
    %v872 = vpop.xlane.xlu0 %871
    %873 = vadd.xlane.f32.xlu0 %v846
    %v874 = vpop.xlane.xlu0 %873
    %875 = vadd.xlane.f32.xlu0 %v847
    %v876 = vpop.xlane.xlu0 %875
    %877 = vadd.xlane.f32.xlu0 %v848
    %v878 = vpop.xlane.xlu0 %877
    %879 = vadd.xlane.f32.xlu0 %v849
    %v880 = vpop.xlane.xlu0 %879
    %881 = vadd.xlane.f32.xlu0 %v850
    %v882 = vpop.xlane.xlu0 %881
    %v883 = vxor.u32 %v852, 2147483648
    %v884 = vxor.u32 %v854, 2147483648
    %v885 = vxor.u32 %v856, 2147483648
    %v886 = vxor.u32 %v858, 2147483648
    %v887 = vxor.u32 %v860, 2147483648
    %v888 = vxor.u32 %v862, 2147483648
    %v889 = vxor.u32 %v864, 2147483648
    %v890 = vxor.u32 %v866, 2147483648
    %v891 = vxor.u32 %v868, 2147483648
    %v892 = vxor.u32 %v870, 2147483648
    %v893 = vxor.u32 %v872, 2147483648
    %v894 = vxor.u32 %v874, 2147483648
    %v895 = vxor.u32 %v876, 2147483648
    %v896 = vxor.u32 %v878, 2147483648
    %v897 = vxor.u32 %v880, 2147483648
    %v898 = vxor.u32 %v882, 2147483648
    %v899 = vmul.f32 %v883, 1.442695
    %v900 = vpow.pop %v899
    %v901 = vmul.f32 %v884, 1.442695
    %v902 = vpow.pop %v901
    %v903 = vmul.f32 %v885, 1.442695
    %v904 = vpow.pop %v903
    %v905 = vmul.f32 %v886, 1.442695
    %v906 = vpow.pop %v905
    %v907 = vmul.f32 %v887, 1.442695
    %v908 = vpow.pop %v907
    %v909 = vmul.f32 %v888, 1.442695
    %v910 = vpow.pop %v909
    %v911 = vmul.f32 %v889, 1.442695
    %v912 = vpow.pop %v911
    %v913 = vmul.f32 %v890, 1.442695
    %v914 = vpow.pop %v913
    %v915 = vmul.f32 %v891, 1.442695
    %v916 = vpow.pop %v915
    %v917 = vmul.f32 %v892, 1.442695
    %v918 = vpow.pop %v917
    %v919 = vmul.f32 %v893, 1.442695
    %v920 = vpow.pop %v919
    %v921 = vmul.f32 %v894, 1.442695
    %v922 = vpow.pop %v921
    %v923 = vmul.f32 %v895, 1.442695
    %v924 = vpow.pop %v923
    %v925 = vmul.f32 %v896, 1.442695
    %v926 = vpow.pop %v925
    %v927 = vmul.f32 %v897, 1.442695
    %v928 = vpow.pop %v927
    %v929 = vmul.f32 %v898, 1.442695
    %v930 = vpow.pop %v929
    %v931 = vadd.f32 %v900, 1.0
    %v932 = vadd.f32 %v902, 1.0
    %v933 = vadd.f32 %v904, 1.0
    %v934 = vadd.f32 %v906, 1.0
    %v935 = vadd.f32 %v908, 1.0
    %v936 = vadd.f32 %v910, 1.0
    %v937 = vadd.f32 %v912, 1.0
    %v938 = vadd.f32 %v914, 1.0
    %v939 = vadd.f32 %v916, 1.0
    %v940 = vadd.f32 %v918, 1.0
    %v941 = vadd.f32 %v920, 1.0
    %v942 = vadd.f32 %v922, 1.0
    %v943 = vadd.f32 %v924, 1.0
    %v944 = vadd.f32 %v926, 1.0
    %v945 = vadd.f32 %v928, 1.0
    %v946 = vadd.f32 %v930, 1.0
    %v947 = vrcp.pop %v931
    %v948 = vmul.f32 1.0, %v947
    %v949 = vrcp.pop %v932
    %v950 = vmul.f32 1.0, %v949
    %v951 = vrcp.pop %v933
    %v952 = vmul.f32 1.0, %v951
    %v953 = vrcp.pop %v934
    %v954 = vmul.f32 1.0, %v953
    %v955 = vrcp.pop %v935
    %v956 = vmul.f32 1.0, %v955
    %v957 = vrcp.pop %v936
    %v958 = vmul.f32 1.0, %v957
    %v959 = vrcp.pop %v937
    %v960 = vmul.f32 1.0, %v959
    %v961 = vrcp.pop %v938
    %v962 = vmul.f32 1.0, %v961
    %v963 = vrcp.pop %v939
    %v964 = vmul.f32 1.0, %v963
    %v965 = vrcp.pop %v940
    %v966 = vmul.f32 1.0, %v965
    %v967 = vrcp.pop %v941
    %v968 = vmul.f32 1.0, %v967
    %v969 = vrcp.pop %v942
    %v970 = vmul.f32 1.0, %v969
    %v971 = vrcp.pop %v943
    %v972 = vmul.f32 1.0, %v971
    %v973 = vrcp.pop %v944
    %v974 = vmul.f32 1.0, %v973
    %v975 = vrcp.pop %v945
    %v976 = vmul.f32 1.0, %v975
    %v977 = vrcp.pop %v946
    %v978 = vmul.f32 1.0, %v977
    %v979 = vmul.f32 %v948, %v757
    %v980 = vmul.f32 %v950, %v762
    %v981 = vmul.f32 %v952, %v767
    %v982 = vmul.f32 %v954, %v772
    %v983 = vmul.f32 %v956, %v777
    %v984 = vmul.f32 %v958, %v782
    %v985 = vmul.f32 %v960, %v787
    %v986 = vmul.f32 %v962, %v792
    %v987 = vmul.f32 %v964, %v797
    %v988 = vmul.f32 %v966, %v802
    %v989 = vmul.f32 %v968, %v807
    %v990 = vmul.f32 %v970, %v812
    %v991 = vmul.f32 %v972, %v817
    %v992 = vmul.f32 %v974, %v822
    %v993 = vmul.f32 %v976, %v827
    %v994 = vmul.f32 %v978, %v832
    %v995 = vadd.f32 %v674, %v979
    %v996 = vadd.f32 %v675, %v980
    %v997 = vadd.f32 %v676, %v981
    %v998 = vadd.f32 %v677, %v982
    %v999 = vadd.f32 %v678, %v983
    %v1000 = vadd.f32 %v679, %v984
    %v1001 = vadd.f32 %v680, %v985
    %v1002 = vadd.f32 %v681, %v986
    %v1003 = vadd.f32 %v682, %v987
    %v1004 = vadd.f32 %v683, %v988
    %v1005 = vadd.f32 %v684, %v989
    %v1006 = vadd.f32 %v685, %v990
    %v1007 = vadd.f32 %v686, %v991
    %v1008 = vadd.f32 %v687, %v992
    %v1009 = vadd.f32 %v688, %v993
    %v1010 = vadd.f32 %v689, %v994
    %1011 = vmatprep.subr.mxu0 0.0
    %1012 = vmatpush1.msra.mxu0 %v832
    %1013 = vmatprep.subr.mxu0 0.0
    %1014 = vmatpush1.msra.mxu0 %v827
    %1015 = vmatprep.subr.mxu0 0.0
    %1016 = vmatpush1.msra.mxu0 %v822
    %1017 = vmatprep.subr.mxu0 0.0
    %1018 = vmatpush1.msra.mxu0 %v817
    %1019 = vmatprep.subr.mxu0 0.0
    %1020 = vmatpush1.msra.mxu0 %v812
    %1021 = vmatprep.subr.mxu0 0.0
    %1022 = vmatpush1.msra.mxu0 %v807
    %1023 = vmatprep.subr.mxu0 0.0
    %1024 = vmatpush1.msra.mxu0 %v802
    %1025 = vmatprep.subr.mxu0 0.0
    %1026 = vmatpush1.msra.mxu0 %v797
    %1027 = vmatprep.subr.mxu0 0.0
    %1028 = vmatpush1.msra.mxu0 %v792
    %1029 = vmatprep.subr.mxu0 0.0
    %1030 = vmatpush1.msra.mxu0 %v787
    %1031 = vmatprep.subr.mxu0 0.0
    %1032 = vmatpush1.msra.mxu0 %v782
    %1033 = vmatprep.subr.mxu0 0.0
    %1034 = vmatpush1.msra.mxu0 %v777
    %1035 = vmatprep.subr.mxu0 0.0
    %1036 = vmatpush1.msra.mxu0 %v772
    %1037 = vmatprep.subr.mxu0 0.0
    %1038 = vmatpush1.msra.mxu0 %v767
    %1039 = vmatprep.subr.mxu0 0.0
    %1040 = vmatpush1.msra.mxu0 %v762
    %1041 = vmatprep.subr.mxu0 0.0
    %1042 = vmatpush1.msra.mxu0 %v757
    %1043 = vmatprep.subr.mxu0 0.0
    %1044 = vmatpush2.msra.mxu0 0.0
    %1045 = vmatprep.subr.mxu0 0.0
    %1046 = vmatpush2.msra.mxu0 0.0
    %1047 = vmatprep.subr.mxu0 0.0
    %1048 = vmatpush2.msra.mxu0 0.0
    %1049 = vmatprep.subr.mxu0 0.0
    %1050 = vmatpush2.msra.mxu0 0.0
    %1051 = vmatprep.subr.mxu0 0.0
    %1052 = vmatpush2.msra.mxu0 0.0
    %1053 = vmatprep.subr.mxu0 0.0
    %1054 = vmatpush2.msra.mxu0 0.0
    %1055 = vmatprep.subr.mxu0 0.0
    %1056 = vmatpush2.msra.mxu0 0.0
    %1057 = vmatprep.subr.mxu0 0.0
    %1058 = vmatpush2.msra.mxu0 0.0
    %1059 = vmatprep.subr.mxu0 0.0
    %1060 = vmatpush2.msra.mxu0 0.0
    %1061 = vmatprep.subr.mxu0 0.0
    %1062 = vmatpush2.msra.mxu0 0.0
    %1063 = vmatprep.subr.mxu0 0.0
    %1064 = vmatpush2.msra.mxu0 0.0
    %1065 = vmatprep.subr.mxu0 0.0
    %1066 = vmatpush2.msra.mxu0 0.0
    %1067 = vmatprep.subr.mxu0 0.0
    %1068 = vmatpush2.msra.mxu0 0.0
    %1069 = vmatprep.subr.mxu0 0.0
    %1070 = vmatpush2.msra.mxu0 0.0
    %1071 = vmatprep.subr.mxu0 0.0
    %1072 = vmatpush2.msra.mxu0 0.0
    %1073 = vmatprep.subr.mxu0 0.0
    %1074 = vmatpush2.msra.mxu0 0.0
    %1075 = vmatprep.mubr.f32.mxu0 0.0
    %1076 = vmatmul.mubr.f32.gmra.mxu0 %v170
    %v1077 = vpop.f32.mrf.mxu0
    %v1078 = vadd.f32 0.0, %v1077
    %v1079 = vpop.f32.mrf.mxu0
    %1080 = vmatprep.mubr.f32.mxu0 0.0
    %1081 = vmatmul.mubr.f32.gmra.mxu0 %v171
    %v1082 = vpop.f32.mrf.mxu0
    %v1083 = vadd.f32 0.0, %v1082
    %v1084 = vpop.f32.mrf.mxu0
    %1085 = vmatprep.mubr.f32.mxu0 0.0
    %1086 = vmatmul.mubr.f32.gmra.mxu0 %v172
    %v1087 = vpop.f32.mrf.mxu0
    %v1088 = vadd.f32 0.0, %v1087
    %v1089 = vpop.f32.mrf.mxu0
    %1090 = vmatprep.mubr.f32.mxu0 0.0
    %1091 = vmatmul.mubr.f32.gmra.mxu0 %v173
    %v1092 = vpop.f32.mrf.mxu0
    %v1093 = vadd.f32 0.0, %v1092
    %v1094 = vpop.f32.mrf.mxu0
    %1095 = vmatprep.mubr.f32.mxu0 0.0
    %1096 = vmatmul.mubr.f32.gmra.mxu0 %v174
    %v1097 = vpop.f32.mrf.mxu0
    %v1098 = vadd.f32 0.0, %v1097
    %v1099 = vpop.f32.mrf.mxu0
    %1100 = vmatprep.mubr.f32.mxu0 0.0
    %1101 = vmatmul.mubr.f32.gmra.mxu0 %v175
    %v1102 = vpop.f32.mrf.mxu0
    %v1103 = vadd.f32 0.0, %v1102
    %v1104 = vpop.f32.mrf.mxu0
    %1105 = vmatprep.mubr.f32.mxu0 0.0
    %1106 = vmatmul.mubr.f32.gmra.mxu0 %v176
    %v1107 = vpop.f32.mrf.mxu0
    %v1108 = vadd.f32 0.0, %v1107
    %v1109 = vpop.f32.mrf.mxu0
    %1110 = vmatprep.mubr.f32.mxu0 0.0
    %1111 = vmatmul.mubr.f32.gmra.mxu0 %v177
    %v1112 = vpop.f32.mrf.mxu0
    %v1113 = vadd.f32 0.0, %v1112
    %v1114 = vpop.f32.mrf.mxu0
    %1115 = vmatprep.mubr.f32.mxu0 0.0
    %1116 = vmatmul.mubr.f32.gmra.mxu0 %v178
    %v1117 = vpop.f32.mrf.mxu0
    %v1118 = vadd.f32 0.0, %v1117
    %v1119 = vpop.f32.mrf.mxu0
    %1120 = vmatprep.mubr.f32.mxu0 0.0
    %1121 = vmatmul.mubr.f32.gmra.mxu0 %v179
    %v1122 = vpop.f32.mrf.mxu0
    %v1123 = vadd.f32 0.0, %v1122
    %v1124 = vpop.f32.mrf.mxu0
    %1125 = vmatprep.mubr.f32.mxu0 0.0
    %1126 = vmatmul.mubr.f32.gmra.mxu0 %v180
    %v1127 = vpop.f32.mrf.mxu0
    %v1128 = vadd.f32 0.0, %v1127
    %v1129 = vpop.f32.mrf.mxu0
    %1130 = vmatprep.mubr.f32.mxu0 0.0
    %1131 = vmatmul.mubr.f32.gmra.mxu0 %v181
    %v1132 = vpop.f32.mrf.mxu0
    %v1133 = vadd.f32 0.0, %v1132
    %v1134 = vpop.f32.mrf.mxu0
    %1135 = vmatprep.mubr.f32.mxu0 0.0
    %1136 = vmatmul.mubr.f32.gmra.mxu0 %v182
    %v1137 = vpop.f32.mrf.mxu0
    %v1138 = vadd.f32 0.0, %v1137
    %v1139 = vpop.f32.mrf.mxu0
    %1140 = vmatprep.mubr.f32.mxu0 0.0
    %1141 = vmatmul.mubr.f32.gmra.mxu0 %v183
    %v1142 = vpop.f32.mrf.mxu0
    %v1143 = vadd.f32 0.0, %v1142
    %v1144 = vpop.f32.mrf.mxu0
    %1145 = vmatprep.mubr.f32.mxu0 0.0
    %1146 = vmatmul.mubr.f32.gmra.mxu0 %v184
    %v1147 = vpop.f32.mrf.mxu0
    %v1148 = vadd.f32 0.0, %v1147
    %v1149 = vpop.f32.mrf.mxu0
    %1150 = vmatprep.mubr.f32.mxu0 0.0
    %1151 = vmatmul.mubr.f32.gmra.mxu0 %v185
    %v1152 = vpop.f32.mrf.mxu0
    %v1153 = vadd.f32 0.0, %v1152
    %v1154 = vpop.f32.mrf.mxu0
    %1155 = vdwg.mxu0
    %v1156 = vmul.f32 %v1078, %v207
    %v1157 = vmul.f32 %v1083, %v207
    %v1158 = vmul.f32 %v1088, %v207
    %v1159 = vmul.f32 %v1093, %v207
    %v1160 = vmul.f32 %v1098, %v207
    %v1161 = vmul.f32 %v1103, %v207
    %v1162 = vmul.f32 %v1108, %v207
    %v1163 = vmul.f32 %v1113, %v207
    %v1164 = vmul.f32 %v1118, %v207
    %v1165 = vmul.f32 %v1123, %v207
    %v1166 = vmul.f32 %v1128, %v207
    %v1167 = vmul.f32 %v1133, %v207
    %v1168 = vmul.f32 %v1138, %v207
    %v1169 = vmul.f32 %v1143, %v207
    %v1170 = vmul.f32 %v1148, %v207
    %v1171 = vmul.f32 %v1153, %v207
    %1172 = vadd.xlane.f32.xlu0 %v1156
    %v1173 = vpop.xlane.xlu0 %1172
    %1174 = vadd.xlane.f32.xlu0 %v1157
    %v1175 = vpop.xlane.xlu0 %1174
    %1176 = vadd.xlane.f32.xlu0 %v1158
    %v1177 = vpop.xlane.xlu0 %1176
    %1178 = vadd.xlane.f32.xlu0 %v1159
    %v1179 = vpop.xlane.xlu0 %1178
    %1180 = vadd.xlane.f32.xlu0 %v1160
    %v1181 = vpop.xlane.xlu0 %1180
    %1182 = vadd.xlane.f32.xlu0 %v1161
    %v1183 = vpop.xlane.xlu0 %1182
    %1184 = vadd.xlane.f32.xlu0 %v1162
    %v1185 = vpop.xlane.xlu0 %1184
    %1186 = vadd.xlane.f32.xlu0 %v1163
    %v1187 = vpop.xlane.xlu0 %1186
    %1188 = vadd.xlane.f32.xlu0 %v1164
    %v1189 = vpop.xlane.xlu0 %1188
    %1190 = vadd.xlane.f32.xlu0 %v1165
    %v1191 = vpop.xlane.xlu0 %1190
    %1192 = vadd.xlane.f32.xlu0 %v1166
    %v1193 = vpop.xlane.xlu0 %1192
    %1194 = vadd.xlane.f32.xlu0 %v1167
    %v1195 = vpop.xlane.xlu0 %1194
    %1196 = vadd.xlane.f32.xlu0 %v1168
    %v1197 = vpop.xlane.xlu0 %1196
    %1198 = vadd.xlane.f32.xlu0 %v1169
    %v1199 = vpop.xlane.xlu0 %1198
    %1200 = vadd.xlane.f32.xlu0 %v1170
    %v1201 = vpop.xlane.xlu0 %1200
    %1202 = vadd.xlane.f32.xlu0 %v1171
    %v1203 = vpop.xlane.xlu0 %1202
    %v1204 = vxor.u32 %v1173, 2147483648
    %v1205 = vxor.u32 %v1175, 2147483648
    %v1206 = vxor.u32 %v1177, 2147483648
    %v1207 = vxor.u32 %v1179, 2147483648
    %v1208 = vxor.u32 %v1181, 2147483648
    %v1209 = vxor.u32 %v1183, 2147483648
    %v1210 = vxor.u32 %v1185, 2147483648
    %v1211 = vxor.u32 %v1187, 2147483648
    %v1212 = vxor.u32 %v1189, 2147483648
    %v1213 = vxor.u32 %v1191, 2147483648
    %v1214 = vxor.u32 %v1193, 2147483648
    %v1215 = vxor.u32 %v1195, 2147483648
    %v1216 = vxor.u32 %v1197, 2147483648
    %v1217 = vxor.u32 %v1199, 2147483648
    %v1218 = vxor.u32 %v1201, 2147483648
    %v1219 = vxor.u32 %v1203, 2147483648
    %v1220 = vmul.f32 %v1204, 1.442695
    %v1221 = vpow.pop %v1220
    %v1222 = vmul.f32 %v1205, 1.442695
    %v1223 = vpow.pop %v1222
    %v1224 = vmul.f32 %v1206, 1.442695
    %v1225 = vpow.pop %v1224
    %v1226 = vmul.f32 %v1207, 1.442695
    %v1227 = vpow.pop %v1226
    %v1228 = vmul.f32 %v1208, 1.442695
    %v1229 = vpow.pop %v1228
    %v1230 = vmul.f32 %v1209, 1.442695
    %v1231 = vpow.pop %v1230
    %v1232 = vmul.f32 %v1210, 1.442695
    %v1233 = vpow.pop %v1232
    %v1234 = vmul.f32 %v1211, 1.442695
    %v1235 = vpow.pop %v1234
    %v1236 = vmul.f32 %v1212, 1.442695
    %v1237 = vpow.pop %v1236
    %v1238 = vmul.f32 %v1213, 1.442695
    %v1239 = vpow.pop %v1238
    %v1240 = vmul.f32 %v1214, 1.442695
    %v1241 = vpow.pop %v1240
    %v1242 = vmul.f32 %v1215, 1.442695
    %v1243 = vpow.pop %v1242
    %v1244 = vmul.f32 %v1216, 1.442695
    %v1245 = vpow.pop %v1244
    %v1246 = vmul.f32 %v1217, 1.442695
    %v1247 = vpow.pop %v1246
    %v1248 = vmul.f32 %v1218, 1.442695
    %v1249 = vpow.pop %v1248
    %v1250 = vmul.f32 %v1219, 1.442695
    %v1251 = vpow.pop %v1250
    %v1252 = vadd.f32 %v1221, 1.0
    %v1253 = vadd.f32 %v1223, 1.0
    %v1254 = vadd.f32 %v1225, 1.0
    %v1255 = vadd.f32 %v1227, 1.0
    %v1256 = vadd.f32 %v1229, 1.0
    %v1257 = vadd.f32 %v1231, 1.0
    %v1258 = vadd.f32 %v1233, 1.0
    %v1259 = vadd.f32 %v1235, 1.0
    %v1260 = vadd.f32 %v1237, 1.0
    %v1261 = vadd.f32 %v1239, 1.0
    %v1262 = vadd.f32 %v1241, 1.0
    %v1263 = vadd.f32 %v1243, 1.0
    %v1264 = vadd.f32 %v1245, 1.0
    %v1265 = vadd.f32 %v1247, 1.0
    %v1266 = vadd.f32 %v1249, 1.0
    %v1267 = vadd.f32 %v1251, 1.0
    %v1268 = vrcp.pop %v1252
    %v1269 = vmul.f32 1.0, %v1268
    %v1270 = vrcp.pop %v1253
    %v1271 = vmul.f32 1.0, %v1270
    %v1272 = vrcp.pop %v1254
    %v1273 = vmul.f32 1.0, %v1272
    %v1274 = vrcp.pop %v1255
    %v1275 = vmul.f32 1.0, %v1274
    %v1276 = vrcp.pop %v1256
    %v1277 = vmul.f32 1.0, %v1276
    %v1278 = vrcp.pop %v1257
    %v1279 = vmul.f32 1.0, %v1278
    %v1280 = vrcp.pop %v1258
    %v1281 = vmul.f32 1.0, %v1280
    %v1282 = vrcp.pop %v1259
    %v1283 = vmul.f32 1.0, %v1282
    %v1284 = vrcp.pop %v1260
    %v1285 = vmul.f32 1.0, %v1284
    %v1286 = vrcp.pop %v1261
    %v1287 = vmul.f32 1.0, %v1286
    %v1288 = vrcp.pop %v1262
    %v1289 = vmul.f32 1.0, %v1288
    %v1290 = vrcp.pop %v1263
    %v1291 = vmul.f32 1.0, %v1290
    %v1292 = vrcp.pop %v1264
    %v1293 = vmul.f32 1.0, %v1292
    %v1294 = vrcp.pop %v1265
    %v1295 = vmul.f32 1.0, %v1294
    %v1296 = vrcp.pop %v1266
    %v1297 = vmul.f32 1.0, %v1296
    %v1298 = vrcp.pop %v1267
    %v1299 = vmul.f32 1.0, %v1298
    %v1300 = vmul.f32 %v1269, %v1078
    %v1301 = vmul.f32 %v1271, %v1083
    %v1302 = vmul.f32 %v1273, %v1088
    %v1303 = vmul.f32 %v1275, %v1093
    %v1304 = vmul.f32 %v1277, %v1098
    %v1305 = vmul.f32 %v1279, %v1103
    %v1306 = vmul.f32 %v1281, %v1108
    %v1307 = vmul.f32 %v1283, %v1113
    %v1308 = vmul.f32 %v1285, %v1118
    %v1309 = vmul.f32 %v1287, %v1123
    %v1310 = vmul.f32 %v1289, %v1128
    %v1311 = vmul.f32 %v1291, %v1133
    %v1312 = vmul.f32 %v1293, %v1138
    %v1313 = vmul.f32 %v1295, %v1143
    %v1314 = vmul.f32 %v1297, %v1148
    %v1315 = vmul.f32 %v1299, %v1153
    %v1316 = vadd.f32 %v995, %v1300
    %v1317 = vadd.f32 %v996, %v1301
    %v1318 = vadd.f32 %v997, %v1302
    %v1319 = vadd.f32 %v998, %v1303
    %v1320 = vadd.f32 %v999, %v1304
    %v1321 = vadd.f32 %v1000, %v1305
    %v1322 = vadd.f32 %v1001, %v1306
    %v1323 = vadd.f32 %v1002, %v1307
    %v1324 = vadd.f32 %v1003, %v1308
    %v1325 = vadd.f32 %v1004, %v1309
    %v1326 = vadd.f32 %v1005, %v1310
    %v1327 = vadd.f32 %v1006, %v1311
    %v1328 = vadd.f32 %v1007, %v1312
    %v1329 = vadd.f32 %v1008, %v1313
    %v1330 = vadd.f32 %v1009, %v1314
    %v1331 = vadd.f32 %v1010, %v1315
    %1332 = vmatprep.subr.mxu0 0.0
    %1333 = vmatpush1.msra.mxu0 %v1153
    %1334 = vmatprep.subr.mxu0 0.0
    %1335 = vmatpush1.msra.mxu0 %v1148
    %1336 = vmatprep.subr.mxu0 0.0
    %1337 = vmatpush1.msra.mxu0 %v1143
    %1338 = vmatprep.subr.mxu0 0.0
    %1339 = vmatpush1.msra.mxu0 %v1138
    %1340 = vmatprep.subr.mxu0 0.0
    %1341 = vmatpush1.msra.mxu0 %v1133
    %1342 = vmatprep.subr.mxu0 0.0
    %1343 = vmatpush1.msra.mxu0 %v1128
    %1344 = vmatprep.subr.mxu0 0.0
    %1345 = vmatpush1.msra.mxu0 %v1123
    %1346 = vmatprep.subr.mxu0 0.0
    %1347 = vmatpush1.msra.mxu0 %v1118
    %1348 = vmatprep.subr.mxu0 0.0
    %1349 = vmatpush1.msra.mxu0 %v1113
    %1350 = vmatprep.subr.mxu0 0.0
    %1351 = vmatpush1.msra.mxu0 %v1108
    %1352 = vmatprep.subr.mxu0 0.0
    %1353 = vmatpush1.msra.mxu0 %v1103
    %1354 = vmatprep.subr.mxu0 0.0
    %1355 = vmatpush1.msra.mxu0 %v1098
    %1356 = vmatprep.subr.mxu0 0.0
    %1357 = vmatpush1.msra.mxu0 %v1093
    %1358 = vmatprep.subr.mxu0 0.0
    %1359 = vmatpush1.msra.mxu0 %v1088
    %1360 = vmatprep.subr.mxu0 0.0
    %1361 = vmatpush1.msra.mxu0 %v1083
    %1362 = vmatprep.subr.mxu0 0.0
    %1363 = vmatpush1.msra.mxu0 %v1078
    %1364 = vmatprep.subr.mxu0 0.0
    %1365 = vmatpush2.msra.mxu0 0.0
    %1366 = vmatprep.subr.mxu0 0.0
    %1367 = vmatpush2.msra.mxu0 0.0
    %1368 = vmatprep.subr.mxu0 0.0
    %1369 = vmatpush2.msra.mxu0 0.0
    %1370 = vmatprep.subr.mxu0 0.0
    %1371 = vmatpush2.msra.mxu0 0.0
    %1372 = vmatprep.subr.mxu0 0.0
    %1373 = vmatpush2.msra.mxu0 0.0
    %1374 = vmatprep.subr.mxu0 0.0
    %1375 = vmatpush2.msra.mxu0 0.0
    %1376 = vmatprep.subr.mxu0 0.0
    %1377 = vmatpush2.msra.mxu0 0.0
    %1378 = vmatprep.subr.mxu0 0.0
    %1379 = vmatpush2.msra.mxu0 0.0
    %1380 = vmatprep.subr.mxu0 0.0
    %1381 = vmatpush2.msra.mxu0 0.0
    %1382 = vmatprep.subr.mxu0 0.0
    %1383 = vmatpush2.msra.mxu0 0.0
    %1384 = vmatprep.subr.mxu0 0.0
    %1385 = vmatpush2.msra.mxu0 0.0
    %1386 = vmatprep.subr.mxu0 0.0
    %1387 = vmatpush2.msra.mxu0 0.0
    %1388 = vmatprep.subr.mxu0 0.0
    %1389 = vmatpush2.msra.mxu0 0.0
    %1390 = vmatprep.subr.mxu0 0.0
    %1391 = vmatpush2.msra.mxu0 0.0
    %1392 = vmatprep.subr.mxu0 0.0
    %1393 = vmatpush2.msra.mxu0 0.0
    %1394 = vmatprep.subr.mxu0 0.0
    %1395 = vmatpush2.msra.mxu0 0.0
    %1396 = vmatprep.mubr.f32.mxu0 0.0
    %1397 = vmatmul.mubr.f32.gmra.mxu0 %v170
    %v1398 = vpop.f32.mrf.mxu0
    %v1399 = vadd.f32 0.0, %v1398
    %v1400 = vpop.f32.mrf.mxu0
    %1401 = vmatprep.mubr.f32.mxu0 0.0
    %1402 = vmatmul.mubr.f32.gmra.mxu0 %v171
    %v1403 = vpop.f32.mrf.mxu0
    %v1404 = vadd.f32 0.0, %v1403
    %v1405 = vpop.f32.mrf.mxu0
    %1406 = vmatprep.mubr.f32.mxu0 0.0
    %1407 = vmatmul.mubr.f32.gmra.mxu0 %v172
    %v1408 = vpop.f32.mrf.mxu0
    %v1409 = vadd.f32 0.0, %v1408
    %v1410 = vpop.f32.mrf.mxu0
    %1411 = vmatprep.mubr.f32.mxu0 0.0
    %1412 = vmatmul.mubr.f32.gmra.mxu0 %v173
    %v1413 = vpop.f32.mrf.mxu0
    %v1414 = vadd.f32 0.0, %v1413
    %v1415 = vpop.f32.mrf.mxu0
    %1416 = vmatprep.mubr.f32.mxu0 0.0
    %1417 = vmatmul.mubr.f32.gmra.mxu0 %v174
    %v1418 = vpop.f32.mrf.mxu0
    %v1419 = vadd.f32 0.0, %v1418
    %v1420 = vpop.f32.mrf.mxu0
    %1421 = vmatprep.mubr.f32.mxu0 0.0
    %1422 = vmatmul.mubr.f32.gmra.mxu0 %v175
    %v1423 = vpop.f32.mrf.mxu0
    %v1424 = vadd.f32 0.0, %v1423
    %v1425 = vpop.f32.mrf.mxu0
    %1426 = vmatprep.mubr.f32.mxu0 0.0
    %1427 = vmatmul.mubr.f32.gmra.mxu0 %v176
    %v1428 = vpop.f32.mrf.mxu0
    %v1429 = vadd.f32 0.0, %v1428
    %v1430 = vpop.f32.mrf.mxu0
    %1431 = vmatprep.mubr.f32.mxu0 0.0
    %1432 = vmatmul.mubr.f32.gmra.mxu0 %v177
    %v1433 = vpop.f32.mrf.mxu0
    %v1434 = vadd.f32 0.0, %v1433
    %v1435 = vpop.f32.mrf.mxu0
    %1436 = vmatprep.mubr.f32.mxu0 0.0
    %1437 = vmatmul.mubr.f32.gmra.mxu0 %v178
    %v1438 = vpop.f32.mrf.mxu0
    %v1439 = vadd.f32 0.0, %v1438
    %v1440 = vpop.f32.mrf.mxu0
    %1441 = vmatprep.mubr.f32.mxu0 0.0
    %1442 = vmatmul.mubr.f32.gmra.mxu0 %v179
    %v1443 = vpop.f32.mrf.mxu0
    %v1444 = vadd.f32 0.0, %v1443
    %v1445 = vpop.f32.mrf.mxu0
    %1446 = vmatprep.mubr.f32.mxu0 0.0
    %1447 = vmatmul.mubr.f32.gmra.mxu0 %v180
    %v1448 = vpop.f32.mrf.mxu0
    %v1449 = vadd.f32 0.0, %v1448
    %v1450 = vpop.f32.mrf.mxu0
    %1451 = vmatprep.mubr.f32.mxu0 0.0
    %1452 = vmatmul.mubr.f32.gmra.mxu0 %v181
    %v1453 = vpop.f32.mrf.mxu0
    %v1454 = vadd.f32 0.0, %v1453
    %v1455 = vpop.f32.mrf.mxu0
    %1456 = vmatprep.mubr.f32.mxu0 0.0
    %1457 = vmatmul.mubr.f32.gmra.mxu0 %v182
    %v1458 = vpop.f32.mrf.mxu0
    %v1459 = vadd.f32 0.0, %v1458
    %v1460 = vpop.f32.mrf.mxu0
    %1461 = vmatprep.mubr.f32.mxu0 0.0
    %1462 = vmatmul.mubr.f32.gmra.mxu0 %v183
    %v1463 = vpop.f32.mrf.mxu0
    %v1464 = vadd.f32 0.0, %v1463
    %v1465 = vpop.f32.mrf.mxu0
    %1466 = vmatprep.mubr.f32.mxu0 0.0
    %1467 = vmatmul.mubr.f32.gmra.mxu0 %v184
    %v1468 = vpop.f32.mrf.mxu0
    %v1469 = vadd.f32 0.0, %v1468
    %v1470 = vpop.f32.mrf.mxu0
    %1471 = vmatprep.mubr.f32.mxu0 0.0
    %1472 = vmatmul.mubr.f32.gmra.mxu0 %v185
    %v1473 = vpop.f32.mrf.mxu0
    %v1474 = vadd.f32 0.0, %v1473
    %v1475 = vpop.f32.mrf.mxu0
    %1476 = vdwg.mxu0
    %v1477 = vmul.f32 %v1399, %v207
    %v1478 = vmul.f32 %v1404, %v207
    %v1479 = vmul.f32 %v1409, %v207
    %v1480 = vmul.f32 %v1414, %v207
    %v1481 = vmul.f32 %v1419, %v207
    %v1482 = vmul.f32 %v1424, %v207
    %v1483 = vmul.f32 %v1429, %v207
    %v1484 = vmul.f32 %v1434, %v207
    %v1485 = vmul.f32 %v1439, %v207
    %v1486 = vmul.f32 %v1444, %v207
    %v1487 = vmul.f32 %v1449, %v207
    %v1488 = vmul.f32 %v1454, %v207
    %v1489 = vmul.f32 %v1459, %v207
    %v1490 = vmul.f32 %v1464, %v207
    %v1491 = vmul.f32 %v1469, %v207
    %v1492 = vmul.f32 %v1474, %v207
    %1493 = vadd.xlane.f32.xlu0 %v1477
    %v1494 = vpop.xlane.xlu0 %1493
    %1495 = vadd.xlane.f32.xlu0 %v1478
    %v1496 = vpop.xlane.xlu0 %1495
    %1497 = vadd.xlane.f32.xlu0 %v1479
    %v1498 = vpop.xlane.xlu0 %1497
    %1499 = vadd.xlane.f32.xlu0 %v1480
    %v1500 = vpop.xlane.xlu0 %1499
    %1501 = vadd.xlane.f32.xlu0 %v1481
    %v1502 = vpop.xlane.xlu0 %1501
    %1503 = vadd.xlane.f32.xlu0 %v1482
    %v1504 = vpop.xlane.xlu0 %1503
    %1505 = vadd.xlane.f32.xlu0 %v1483
    %v1506 = vpop.xlane.xlu0 %1505
    %1507 = vadd.xlane.f32.xlu0 %v1484
    %v1508 = vpop.xlane.xlu0 %1507
    %1509 = vadd.xlane.f32.xlu0 %v1485
    %v1510 = vpop.xlane.xlu0 %1509
    %1511 = vadd.xlane.f32.xlu0 %v1486
    %v1512 = vpop.xlane.xlu0 %1511
    %1513 = vadd.xlane.f32.xlu0 %v1487
    %v1514 = vpop.xlane.xlu0 %1513
    %1515 = vadd.xlane.f32.xlu0 %v1488
    %v1516 = vpop.xlane.xlu0 %1515
    %1517 = vadd.xlane.f32.xlu0 %v1489
    %v1518 = vpop.xlane.xlu0 %1517
    %1519 = vadd.xlane.f32.xlu0 %v1490
    %v1520 = vpop.xlane.xlu0 %1519
    %1521 = vadd.xlane.f32.xlu0 %v1491
    %v1522 = vpop.xlane.xlu0 %1521
    %1523 = vadd.xlane.f32.xlu0 %v1492
    %v1524 = vpop.xlane.xlu0 %1523
    %v1525 = vxor.u32 %v1494, 2147483648
    %v1526 = vxor.u32 %v1496, 2147483648
    %v1527 = vxor.u32 %v1498, 2147483648
    %v1528 = vxor.u32 %v1500, 2147483648
    %v1529 = vxor.u32 %v1502, 2147483648
    %v1530 = vxor.u32 %v1504, 2147483648
    %v1531 = vxor.u32 %v1506, 2147483648
    %v1532 = vxor.u32 %v1508, 2147483648
    %v1533 = vxor.u32 %v1510, 2147483648
    %v1534 = vxor.u32 %v1512, 2147483648
    %v1535 = vxor.u32 %v1514, 2147483648
    %v1536 = vxor.u32 %v1516, 2147483648
    %v1537 = vxor.u32 %v1518, 2147483648
    %v1538 = vxor.u32 %v1520, 2147483648
    %v1539 = vxor.u32 %v1522, 2147483648
    %v1540 = vxor.u32 %v1524, 2147483648
    %v1541 = vmul.f32 %v1525, 1.442695
    %v1542 = vpow.pop %v1541
    %v1543 = vmul.f32 %v1526, 1.442695
    %v1544 = vpow.pop %v1543
    %v1545 = vmul.f32 %v1527, 1.442695
    %v1546 = vpow.pop %v1545
    %v1547 = vmul.f32 %v1528, 1.442695
    %v1548 = vpow.pop %v1547
    %v1549 = vmul.f32 %v1529, 1.442695
    %v1550 = vpow.pop %v1549
    %v1551 = vmul.f32 %v1530, 1.442695
    %v1552 = vpow.pop %v1551
    %v1553 = vmul.f32 %v1531, 1.442695
    %v1554 = vpow.pop %v1553
    %v1555 = vmul.f32 %v1532, 1.442695
    %v1556 = vpow.pop %v1555
    %v1557 = vmul.f32 %v1533, 1.442695
    %v1558 = vpow.pop %v1557
    %v1559 = vmul.f32 %v1534, 1.442695
    %v1560 = vpow.pop %v1559
    %v1561 = vmul.f32 %v1535, 1.442695
    %v1562 = vpow.pop %v1561
    %v1563 = vmul.f32 %v1536, 1.442695
    %v1564 = vpow.pop %v1563
    %v1565 = vmul.f32 %v1537, 1.442695
    %v1566 = vpow.pop %v1565
    %v1567 = vmul.f32 %v1538, 1.442695
    %v1568 = vpow.pop %v1567
    %v1569 = vmul.f32 %v1539, 1.442695
    %v1570 = vpow.pop %v1569
    %v1571 = vmul.f32 %v1540, 1.442695
    %v1572 = vpow.pop %v1571
    %v1573 = vadd.f32 %v1542, 1.0
    %v1574 = vadd.f32 %v1544, 1.0
    %v1575 = vadd.f32 %v1546, 1.0
    %v1576 = vadd.f32 %v1548, 1.0
    %v1577 = vadd.f32 %v1550, 1.0
    %v1578 = vadd.f32 %v1552, 1.0
    %v1579 = vadd.f32 %v1554, 1.0
    %v1580 = vadd.f32 %v1556, 1.0
    %v1581 = vadd.f32 %v1558, 1.0
    %v1582 = vadd.f32 %v1560, 1.0
    %v1583 = vadd.f32 %v1562, 1.0
    %v1584 = vadd.f32 %v1564, 1.0
    %v1585 = vadd.f32 %v1566, 1.0
    %v1586 = vadd.f32 %v1568, 1.0
    %v1587 = vadd.f32 %v1570, 1.0
    %v1588 = vadd.f32 %v1572, 1.0
    %v1589 = vrcp.pop %v1573
    %v1590 = vmul.f32 1.0, %v1589
    %v1591 = vrcp.pop %v1574
    %v1592 = vmul.f32 1.0, %v1591
    %v1593 = vrcp.pop %v1575
    %v1594 = vmul.f32 1.0, %v1593
    %v1595 = vrcp.pop %v1576
    %v1596 = vmul.f32 1.0, %v1595
    %v1597 = vrcp.pop %v1577
    %v1598 = vmul.f32 1.0, %v1597
    %v1599 = vrcp.pop %v1578
    %v1600 = vmul.f32 1.0, %v1599
    %v1601 = vrcp.pop %v1579
    %v1602 = vmul.f32 1.0, %v1601
    %v1603 = vrcp.pop %v1580
    %v1604 = vmul.f32 1.0, %v1603
    %v1605 = vrcp.pop %v1581
    %v1606 = vmul.f32 1.0, %v1605
    %v1607 = vrcp.pop %v1582
    %v1608 = vmul.f32 1.0, %v1607
    %v1609 = vrcp.pop %v1583
    %v1610 = vmul.f32 1.0, %v1609
    %v1611 = vrcp.pop %v1584
    %v1612 = vmul.f32 1.0, %v1611
    %v1613 = vrcp.pop %v1585
    %v1614 = vmul.f32 1.0, %v1613
    %v1615 = vrcp.pop %v1586
    %v1616 = vmul.f32 1.0, %v1615
    %v1617 = vrcp.pop %v1587
    %v1618 = vmul.f32 1.0, %v1617
    %v1619 = vrcp.pop %v1588
    %v1620 = vmul.f32 1.0, %v1619
    %v1621 = vmul.f32 %v1590, %v1399
    %v1622 = vmul.f32 %v1592, %v1404
    %v1623 = vmul.f32 %v1594, %v1409
    %v1624 = vmul.f32 %v1596, %v1414
    %v1625 = vmul.f32 %v1598, %v1419
    %v1626 = vmul.f32 %v1600, %v1424
    %v1627 = vmul.f32 %v1602, %v1429
    %v1628 = vmul.f32 %v1604, %v1434
    %v1629 = vmul.f32 %v1606, %v1439
    %v1630 = vmul.f32 %v1608, %v1444
    %v1631 = vmul.f32 %v1610, %v1449
    %v1632 = vmul.f32 %v1612, %v1454
    %v1633 = vmul.f32 %v1614, %v1459
    %v1634 = vmul.f32 %v1616, %v1464
    %v1635 = vmul.f32 %v1618, %v1469
    %v1636 = vmul.f32 %v1620, %v1474
    %v1637 = vadd.f32 %v1316, %v1621
    %v1638 = vadd.f32 %v1317, %v1622
    %v1639 = vadd.f32 %v1318, %v1623
    %v1640 = vadd.f32 %v1319, %v1624
    %v1641 = vadd.f32 %v1320, %v1625
    %v1642 = vadd.f32 %v1321, %v1626
    %v1643 = vadd.f32 %v1322, %v1627
    %v1644 = vadd.f32 %v1323, %v1628
    %v1645 = vadd.f32 %v1324, %v1629
    %v1646 = vadd.f32 %v1325, %v1630
    %v1647 = vadd.f32 %v1326, %v1631
    %v1648 = vadd.f32 %v1327, %v1632
    %v1649 = vadd.f32 %v1328, %v1633
    %v1650 = vadd.f32 %v1329, %v1634
    %v1651 = vadd.f32 %v1330, %v1635
    %v1652 = vadd.f32 %v1331, %v1636
    %1653 = vst [vmem:[#allocation5] sm:$0xff] %v1637
    %1654 = vst [vmem:[#allocation5 + $0x8] sm:$0xff] %v1638
    %1655 = vst [vmem:[#allocation5 + $0x10] sm:$0xff] %v1639
    %1656 = vst [vmem:[#allocation5 + $0x18] sm:$0xff] %v1640
    %1657 = vst [vmem:[#allocation5 + $0x20] sm:$0xff] %v1641
    %1658 = vst [vmem:[#allocation5 + $0x28] sm:$0xff] %v1642
    %1659 = vst [vmem:[#allocation5 + $0x30] sm:$0xff] %v1643
    %1660 = vst [vmem:[#allocation5 + $0x38] sm:$0xff] %v1644
    %1661 = vst [vmem:[#allocation5 + $0x40] sm:$0xff] %v1645
    %1662 = vst [vmem:[#allocation5 + $0x48] sm:$0xff] %v1646
    %1663 = vst [vmem:[#allocation5 + $0x50] sm:$0xff] %v1647
    %1664 = vst [vmem:[#allocation5 + $0x58] sm:$0xff] %v1648
    %1665 = vst [vmem:[#allocation5 + $0x60] sm:$0xff] %v1649
    %1666 = vst [vmem:[#allocation5 + $0x68] sm:$0xff] %v1650
    %1667 = vst [vmem:[#allocation5 + $0x70] sm:$0xff] %v1651
    %1668 = vst [vmem:[#allocation5 + $0x78] sm:$0xff] %v1652
    // Predicated region
    $region26: #{tpu_custom_call.1} parent=1 // pred_check
      _
    $region27: #{tpu_custom_call.1} parent=1 // pred_check_branch
      %1670 = sbr.rel (0) target = $region29
    $region28: #{tpu_custom_call.1} parent=1 // pred_region
      %s1672 = ssub.s32 2048, 2048
      %1673 = vsyncadd [#allocation4], %s1672
      %s1674 = sshll.u32 [#allocation5], 4
      %s1675 = int_to_ptr.vmem [resolvable:$true] %s1674
      %1680 = dma.vmem_to_hbm [thread:$0]  %s1675, 2048, %s5, [#allocation4], 128, 128, 8
    $region29: #{tpu_custom_call.1} parent=1 // pred_fallthru
      _
    // Predicated region
    $region30: #{tpu_custom_call.1} parent=1 // pred_check
      _
    $region31: #{tpu_custom_call.1} parent=1 // pred_check_branch
      %1682 = sbr.rel (0) target = $region33
    $region32: #{tpu_custom_call.1} parent=1 // pred_region
      %1683 = dma.done [#allocation4], 2048
    $region33: #{tpu_custom_call.1} parent=1 // pred_fallthru
      _
    %1684 = vsyncpa [#allocation3], 1
    %1685 = vsyncpa [#allocation4], 1

</llo_original>
